<compile_context>
chip_gen: v6e
topology: v6e:2x2x1
jax: 0.10.0
libtpu: 0.0.40
codegen_flags: <defaults>
</compile_context>

<pallas_src>
import jax
import jax.numpy as jnp
from jax import lax
from jax.experimental import pallas as pl
from jax.experimental.pallas import tpu as pltpu

_HIGHEST = lax.Precision.HIGHEST


def _self_attention_kernel(gamma_ref,        # SMEM (1, 1)
                           q_ref,            # VMEM (1, tq, C8)  query tile
                           k_ref,            # VMEM (1, C8, tk)  key tile
                           v_ref,            # VMEM (1, C,  tk)  value tile
                           x_ref,            # VMEM (1, C,  tq)  residual tile
                           o_ref,            # VMEM (1, C,  tq)
                           m_ref,            # VMEM (tq, 1) running max
                           l_ref,            # VMEM (tq, 1) running sum
                           acc_ref):         # VMEM (tq, C) attn-weighted sum of v
    ki = pl.program_id(2)

    @pl.when(ki == 0)
    def _init():
        m_ref[...] = jnp.full_like(m_ref, -jnp.inf)
        l_ref[...] = jnp.zeros_like(l_ref)
        acc_ref[...] = jnp.zeros_like(acc_ref)

    # Energy tile: (tq, C8) @ (C8, tk) -> (tq, tk)
    s = jnp.dot(q_ref[0], k_ref[0], preferred_element_type=jnp.float32)

    # Online softmax update.
    m_prev = m_ref[...]
    m_new = jnp.maximum(m_prev, jnp.max(s, axis=-1, keepdims=True))   # (tq, 1)
    alpha = jnp.exp(m_prev - m_new)
    p = jnp.exp(s - m_new)                                            # (tq, tk)
    l_ref[...] = alpha * l_ref[...] + jnp.sum(p, axis=-1, keepdims=True)
    # acc[i, c] += sum_j p[i, j] * v[c, j]   (contract over tk)
    acc_ref[...] = alpha * acc_ref[...] + lax.dot_general(
        p, v_ref[0], (((1,), (1,)), ((), ())),
        preferred_element_type=jnp.float32)
    m_ref[...] = m_new

    @pl.when(ki == pl.num_programs(2) - 1)
    def _finalize():
        attn_v = acc_ref[...] / l_ref[...]                            # (tq, C)
        # Single small transpose per query tile -> lane-dense (C, tq) store.
        o_ref[0] = gamma_ref[0, 0] * attn_v.T + x_ref[0]


def _pick_tile(n, target):
    """Largest tile <= target that is a multiple of 128 dividing n, else n."""
    if n <= target:
        return n
    t = (target // 128) * 128
    while t >= 128:
        if n % t == 0:
            return t
        t -= 128
    return n


def _project_qkv(x_bcn, params):
    """Shared 1x1-conv projections (identical math for kernel path and ref)."""
    wq, bq, wk, bk, wv, bv, _ = params
    q_bno = (jnp.einsum("oc,bcn->bno", wq, x_bcn, precision=_HIGHEST)
             + bq[None, None, :])                    # (B, N, C8)
    k_bon = (jnp.einsum("oc,bcn->bon", wk, x_bcn, precision=_HIGHEST)
             + bk[None, :, None])                    # (B, C8, N)
    v_bon = (jnp.einsum("oc,bcn->bon", wv, x_bcn, precision=_HIGHEST)
             + bv[None, :, None])                    # (B, C, N)
    return q_bno, k_bon, v_bon


def self_attention_pallas(x_nchw, params, *, block_q=256, block_k=256):
    """x_nchw: (B, C, H, W) float32.  Returns (B, C, H, W) float32."""
    B, C, H, W = x_nchw.shape
    N = H * W
    gamma = params[6]
    C8 = params[0].shape[0]

    # Channels-first flattening: pure reshape, no HBM transpose.
    x_bcn = x_nchw.reshape(B, C, N)

    # 1x1-conv projections as GEMMs, once, outside the O(N^2) grid loop.
    q_bno, k_bon, v_bon = _project_qkv(x_bcn, params)

    tq = _pick_tile(N, block_q)
    tk = _pick_tile(N, block_k)
    grid = (B, N // tq, N // tk)

    gamma2 = gamma.reshape(1, 1).astype(jnp.float32)

    out_bcn = pl.pallas_call(
        _self_attention_kernel,
        out_shape=jax.ShapeDtypeStruct((B, C, N), jnp.float32),
        grid_spec=pltpu.PrefetchScalarGridSpec(
            num_scalar_prefetch=0,
            grid=grid,
            in_specs=[
                pl.BlockSpec(memory_space=pltpu.SMEM),                    # gamma
                pl.BlockSpec((1, tq, C8), lambda b, qi, ki: (b, qi, 0)),  # q
                pl.BlockSpec((1, C8, tk), lambda b, qi, ki: (b, 0, ki)),  # k
                pl.BlockSpec((1, C, tk), lambda b, qi, ki: (b, 0, ki)),   # v
                pl.BlockSpec((1, C, tq), lambda b, qi, ki: (b, 0, qi)),   # x
            ],
            out_specs=pl.BlockSpec((1, C, tq), lambda b, qi, ki: (b, 0, qi)),
            scratch_shapes=[
                pltpu.VMEM((tq, 1), jnp.float32),   # running max
                pltpu.VMEM((tq, 1), jnp.float32),   # running sum
                pltpu.VMEM((tq, C), jnp.float32),   # accumulator
            ],
        ),
        compiler_params=pltpu.CompilerParams(
            dimension_semantics=("parallel", "parallel", "arbitrary"),
            # Safe on all generations (raises v5e's 16 MiB scoped default,
            # <= physical VMEM on v7x).
            vmem_limit_bytes=32 * 1024 * 1024,
        ),
    )(gamma2, q_bno, k_bon, v_bon, x_bcn)

    return out_bcn.reshape(B, C, H, W)


def self_attention_ref(x_nchw, params):
    """Pure-JAX reference mirroring the PyTorch forward exactly."""
    gamma = params[6]
    B, C, H, W = x_nchw.shape
    N = H * W
    x_bcn = x_nchw.reshape(B, C, N)
    q, k, v = _project_qkv(x_bcn, params)                    # same projections
    energy = jnp.einsum("bic,bcj->bij", q, k, precision=_HIGHEST)   # (B, N, N)
    attn = jax.nn.softmax(energy, axis=-1)
    out = jnp.einsum("bcj,bij->bci", v, attn, precision=_HIGHEST)   # (B, C, N)
    out = out.reshape(B, C, H, W)
    return gamma.reshape(()) * out + x_nchw


def make_params(key, C):
    C8 = C // 8
    k1, k2, k3, k4, k5, k6 = jax.random.split(key, 6)
    scale = 0.05
    wq = scale * jax.random.normal(k1, (C8, C), jnp.float32)
    bq = scale * jax.random.normal(k2, (C8,), jnp.float32)
    wk = scale * jax.random.normal(k3, (C8, C), jnp.float32)
    bk = scale * jax.random.normal(k4, (C8,), jnp.float32)
    wv = scale * jax.random.normal(k5, (C, C), jnp.float32)
    bv = scale * jax.random.normal(k6, (C,), jnp.float32)
    # PyTorch init sets gamma=0 (output == x); use a nonzero value so the
    # attention path is actually exercised/verified.
    gamma = jnp.array([0.5], jnp.float32)
    return (wq, bq, wk, bk, wv, bv, gamma)


if __name__ == "__main__":
    B, C, H, W = 2, 64, 16, 16      # N = 256; C must be divisible by 8
    key = jax.random.PRNGKey(0)
    kx, kp = jax.random.split(key)
    x = jax.random.normal(kx, (B, C, H, W), jnp.float32)
    params = make_params(kp, C)

    ref = jax.block_until_ready(self_attention_ref(x, params))

    # Multi-tile path: grid (B, 2, 2) -> exercises online-softmax accumulation.
    out_tiled = jax.block_until_ready(
        self_attention_pallas(x, params, block_q=128, block_k=128))
    # Single-kv-tile path: grid (B, 1, 1).
    out_mono = jax.block_until_ready(
        self_attention_pallas(x, params, block_q=256, block_k=256))

    for out in (out_tiled, out_mono):
        assert out.shape == (B, C, H, W)
        err = float(jnp.max(jnp.abs(out - ref)))
        # 2e-3 absorbs MXU f32-emulation rounding; the attention-path signal
        # itself is O(1e-1), so this still catches any semantic error.
        assert jnp.allclose(out, ref, atol=2e-3, rtol=2e-3), err
    print("KERNEL_OK")
</pallas_src>

<mosaic_0001>
module attributes {stable_mosaic.version = 11 : i64} {
  func.func @_self_attention_kernel(%arg0: i32, %arg1: i32, %arg2: i32, %arg3: memref<1x1xf32, #tpu.memory_space<smem>>, %arg4: memref<1x128x8xf32, #tpu.memory_space<vmem>>, %arg5: memref<1x8x128xf32, #tpu.memory_space<vmem>>, %arg6: memref<1x64x128xf32, #tpu.memory_space<vmem>>, %arg7: memref<1x64x128xf32, #tpu.memory_space<vmem>>, %arg8: memref<1x64x128xf32, #tpu.memory_space<vmem>>, %arg9: memref<128x1xf32, #tpu.memory_space<vmem>>, %arg10: memref<128x1xf32, #tpu.memory_space<vmem>>, %arg11: memref<128x64xf32, #tpu.memory_space<vmem>>) attributes {dimension_semantics = [#tpu.dimension_semantics<parallel>, #tpu.dimension_semantics<parallel>, #tpu.dimension_semantics<arbitrary>], iteration_bounds = array<i64: 2, 2, 2>, scalar_prefetch = 0 : i64, scratch_operands = 3 : i64, tpu.core_type = #tpu.core_type<tc>, window_params = [{transform_indices = @transform_0, window_bounds = array<i64: 1, 1>}, {transform_indices = @transform_1, window_bounds = array<i64: 1, 128, 8>}, {transform_indices = @transform_2, window_bounds = array<i64: 1, 8, 128>}, {transform_indices = @transform_3, window_bounds = array<i64: 1, 64, 128>}, {transform_indices = @transform_4, window_bounds = array<i64: 1, 64, 128>}, {transform_indices = @transform_5, window_bounds = array<i64: 1, 64, 128>}]} {
    %c0_i32 = arith.constant 0 : i32
    %0 = arith.cmpi eq, %arg2, %c0_i32 : i32
    %1 = arith.extui %0 : i1 to i32
    %c0_i32_0 = arith.constant 0 : i32
    %2 = arith.cmpi ne, %1, %c0_i32_0 : i32
    scf.if %2 {
      %cst_25 = arith.constant 0xFF800000 : f32
      %35 = vector.broadcast %cst_25 : f32 to vector<128x1xf32>
      %c0_26 = arith.constant 0 : index
      %c0_27 = arith.constant 0 : index
      %36 = vector.load %arg9[%c0_26, %c0_27] : memref<128x1xf32, #tpu.memory_space<vmem>>, vector<128x1xf32>
      tpu.vector_store %arg9[%c0_26, %c0_27], %35 {strides = array<i32>} : memref<128x1xf32, #tpu.memory_space<vmem>>, vector<128x1xf32>,
      %cst_28 = arith.constant 0.000000e+00 : f32
      %37 = vector.broadcast %cst_28 : f32 to vector<128x1xf32>
      %c0_29 = arith.constant 0 : index
      %c0_30 = arith.constant 0 : index
      %38 = vector.load %arg10[%c0_29, %c0_30] : memref<128x1xf32, #tpu.memory_space<vmem>>, vector<128x1xf32>
      tpu.vector_store %arg10[%c0_29, %c0_30], %37 {strides = array<i32>} : memref<128x1xf32, #tpu.memory_space<vmem>>, vector<128x1xf32>,
      %cst_31 = arith.constant 0.000000e+00 : f32
      %39 = vector.broadcast %cst_31 : f32 to vector<128x64xf32>
      %c0_32 = arith.constant 0 : index
      %c0_33 = arith.constant 0 : index
      %40 = vector.load %arg11[%c0_32, %c0_33] : memref<128x64xf32, #tpu.memory_space<vmem>>, vector<128x64xf32>
      tpu.vector_store %arg11[%c0_32, %c0_33], %39 {strides = array<i32>} : memref<128x64xf32, #tpu.memory_space<vmem>>, vector<128x64xf32>,
    } else {
    }
    %c0 = arith.constant 0 : index
    %c0_1 = arith.constant 0 : index
    %c0_2 = arith.constant 0 : index
    %3 = vector.load %arg4[%c0, %c0_1, %c0_2] : memref<1x128x8xf32, #tpu.memory_space<vmem>>, vector<1x128x8xf32>
    %4 = vector.shape_cast %3 : vector<1x128x8xf32> to vector<128x8xf32>
    %c0_3 = arith.constant 0 : index
    %c0_4 = arith.constant 0 : index
    %c0_5 = arith.constant 0 : index
    %5 = vector.load %arg5[%c0_3, %c0_4, %c0_5] : memref<1x8x128xf32, #tpu.memory_space<vmem>>, vector<1x8x128xf32>
    %6 = vector.shape_cast %5 : vector<1x8x128xf32> to vector<8x128xf32>
    %cst = arith.constant dense<0.000000e+00> : vector<128x128xf32>
    %7 = tpu.matmul %4, %6, %cst {dimension_numbers = #tpu.dot_dimension_numbers<[1], [0], [0], [1], [0, 0, 1, 1], [], []>} : vector<128x8xf32>, vector<8x128xf32>, vector<128x128xf32> -> vector<128x128xf32>
    %c0_6 = arith.constant 0 : index
    %c0_7 = arith.constant 0 : index
    %8 = vector.load %arg9[%c0_6, %c0_7] : memref<128x1xf32, #tpu.memory_space<vmem>>, vector<128x1xf32>
    %cst_8 = arith.constant dense<0xFF800000> : vector<128xf32>
    %9 = vector.multi_reduction <maximumf>, %7, %cst_8 [1] : vector<128x128xf32> to vector<128xf32>
    %10 = vector.shape_cast %9 : vector<128xf32> to vector<128x1xf32>
    %11 = arith.maximumf %8, %10 : vector<128x1xf32>
    %12 = arith.subf %8, %11 : vector<128x1xf32>
    %13 = math.exp %12 : vector<128x1xf32>
    %14 = vector.broadcast %11 : vector<128x1xf32> to vector<128x128xf32>
    %15 = arith.subf %7, %14 : vector<128x128xf32>
    %16 = math.exp %15 : vector<128x128xf32>
    %c0_9 = arith.constant 0 : index
    %c0_10 = arith.constant 0 : index
    %17 = vector.load %arg10[%c0_9, %c0_10] : memref<128x1xf32, #tpu.memory_space<vmem>>, vector<128x1xf32>
    %18 = arith.mulf %13, %17 : vector<128x1xf32>
    %cst_11 = arith.constant dense<0.000000e+00> : vector<128xf32>
    %19 = vector.multi_reduction <add>, %16, %cst_11 [1] : vector<128x128xf32> to vector<128xf32>
    %20 = vector.shape_cast %19 : vector<128xf32> to vector<128x1xf32>
    %21 = arith.addf %18, %20 : vector<128x1xf32>
    %c0_12 = arith.constant 0 : index
    %c0_13 = arith.constant 0 : index
    %22 = vector.load %arg10[%c0_12, %c0_13] : memref<128x1xf32, #tpu.memory_space<vmem>>, vector<128x1xf32>
    tpu.vector_store %arg10[%c0_12, %c0_13], %21 {strides = array<i32>} : memref<128x1xf32, #tpu.memory_space<vmem>>, vector<128x1xf32>,
    %c0_14 = arith.constant 0 : index
    %c0_15 = arith.constant 0 : index
    %23 = vector.load %arg11[%c0_14, %c0_15] : memref<128x64xf32, #tpu.memory_space<vmem>>, vector<128x64xf32>
    %24 = vector.broadcast %13 : vector<128x1xf32> to vector<128x64xf32>
    %25 = arith.mulf %24, %23 : vector<128x64xf32>
    %c0_16 = arith.constant 0 : index
    %c0_17 = arith.constant 0 : index
    %c0_18 = arith.constant 0 : index
    %26 = vector.load %arg6[%c0_16, %c0_17, %c0_18] : memref<1x64x128xf32, #tpu.memory_space<vmem>>, vector<1x64x128xf32>
    %27 = vector.shape_cast %26 : vector<1x64x128xf32> to vector<64x128xf32>
    %cst_19 = arith.constant dense<0.000000e+00> : vector<128x64xf32>
    %28 = tpu.matmul %16, %27, %cst_19 {dimension_numbers = #tpu.dot_dimension_numbers<[1], [1], [0], [0], [0, 0, 1, 0], [], []>} : vector<128x128xf32>, vector<64x128xf32>, vector<128x64xf32> -> vector<128x64xf32>
    %29 = arith.addf %25, %28 : vector<128x64xf32>
    %c0_20 = arith.constant 0 : index
    %c0_21 = arith.constant 0 : index
    %30 = vector.load %arg11[%c0_20, %c0_21] : memref<128x64xf32, #tpu.memory_space<vmem>>, vector<128x64xf32>
    tpu.vector_store %arg11[%c0_20, %c0_21], %29 {strides = array<i32>} : memref<128x64xf32, #tpu.memory_space<vmem>>, vector<128x64xf32>,
    %c0_22 = arith.constant 0 : index
    %c0_23 = arith.constant 0 : index
    %31 = vector.load %arg9[%c0_22, %c0_23] : memref<128x1xf32, #tpu.memory_space<vmem>>, vector<128x1xf32>
    tpu.vector_store %arg9[%c0_22, %c0_23], %11 {strides = array<i32>} : memref<128x1xf32, #tpu.memory_space<vmem>>, vector<128x1xf32>,
    %c1_i32 = arith.constant 1 : i32
    %32 = arith.cmpi eq, %arg2, %c1_i32 : i32
    %33 = arith.extui %32 : i1 to i32
    %c0_i32_24 = arith.constant 0 : i32
    %34 = arith.cmpi ne, %33, %c0_i32_24 : i32
    scf.if %34 {
      %c0_25 = arith.constant 0 : index
      %c0_26 = arith.constant 0 : index
      %35 = vector.load %arg11[%c0_25, %c0_26] : memref<128x64xf32, #tpu.memory_space<vmem>>, vector<128x64xf32>
      %c0_27 = arith.constant 0 : index
      %c0_28 = arith.constant 0 : index
      %36 = vector.load %arg10[%c0_27, %c0_28] : memref<128x1xf32, #tpu.memory_space<vmem>>, vector<128x1xf32>
      %37 = vector.broadcast %36 : vector<128x1xf32> to vector<128x64xf32>
      %38 = arith.divf %35, %37 : vector<128x64xf32>
      %c0_29 = arith.constant 0 : index
      %c0_30 = arith.constant 0 : index
      %39 = memref.load %arg3[%c0_29, %c0_30] : memref<1x1xf32, #tpu.memory_space<smem>>
      %40 = tpu.transpose %38, [1, 0] : vector<128x64xf32> -> vector<64x128xf32>
      %41 = vector.broadcast %39 : f32 to vector<64x128xf32>
      %42 = arith.mulf %41, %40 : vector<64x128xf32>
      %c0_31 = arith.constant 0 : index
      %c0_32 = arith.constant 0 : index
      %c0_33 = arith.constant 0 : index
      %43 = vector.load %arg7[%c0_31, %c0_32, %c0_33] : memref<1x64x128xf32, #tpu.memory_space<vmem>>, vector<1x64x128xf32>
      %44 = vector.shape_cast %43 : vector<1x64x128xf32> to vector<64x128xf32>
      %45 = arith.addf %42, %44 : vector<64x128xf32>
      %c0_34 = arith.constant 0 : index
      %c0_35 = arith.constant 0 : index
      %c0_36 = arith.constant 0 : index
      %46 = vector.load %arg8[%c0_34, %c0_35, %c0_36] : memref<1x64x128xf32, #tpu.memory_space<vmem>>, vector<1x64x128xf32>
      %47 = vector.shape_cast %46 : vector<1x64x128xf32> to vector<64x128xf32>
      %48 = vector.shape_cast %45 : vector<64x128xf32> to vector<1x64x128xf32>
      tpu.vector_store %arg8[%c0_34, %c0_35, %c0_36], %48 {strides = array<i32>} : memref<1x64x128xf32, #tpu.memory_space<vmem>>, vector<1x64x128xf32>,
    } else {
    }
    return
  }
  func.func @transform_0(%arg0: i32, %arg1: i32, %arg2: i32) -> (i32, i32) {
    %c0_i32 = arith.constant 0 : i32
    %c0_i32_0 = arith.constant 0 : i32
    %c0_i32_1 = arith.constant 0 : i32
    return %c0_i32, %c0_i32_0 : i32, i32
  }
  func.func @transform_1(%arg0: i32, %arg1: i32, %arg2: i32) -> (i32, i32, i32) {
    %c0_i32 = arith.constant 0 : i32
    %c0_i32_0 = arith.constant 0 : i32
    return %arg0, %arg1, %c0_i32 : i32, i32, i32
  }
  func.func @transform_2(%arg0: i32, %arg1: i32, %arg2: i32) -> (i32, i32, i32) {
    %c0_i32 = arith.constant 0 : i32
    %c0_i32_0 = arith.constant 0 : i32
    return %arg0, %c0_i32, %arg2 : i32, i32, i32
  }
  func.func @transform_3(%arg0: i32, %arg1: i32, %arg2: i32) -> (i32, i32, i32) {
    %c0_i32 = arith.constant 0 : i32
    %c0_i32_0 = arith.constant 0 : i32
    return %arg0, %c0_i32, %arg2 : i32, i32, i32
  }
  func.func @transform_4(%arg0: i32, %arg1: i32, %arg2: i32) -> (i32, i32, i32) {
    %c0_i32 = arith.constant 0 : i32
    %c0_i32_0 = arith.constant 0 : i32
    return %arg0, %c0_i32, %arg1 : i32, i32, i32
  }
  func.func @transform_5(%arg0: i32, %arg1: i32, %arg2: i32) -> (i32, i32, i32) {
    %c0_i32 = arith.constant 0 : i32
    %c0_i32_0 = arith.constant 0 : i32
    return %arg0, %c0_i32, %arg1 : i32, i32, i32
  }
}

</mosaic_0001>

<llo_original>
// kernel: tpu_custom_call.1
$region0: #{tpu_custom_call.1}
  #allocation0 [shape = 'u32[]', space=smem, size = 0x4, offset = 0x4, fixed_abs, tag = 'smem constant byte address 0x4 - core index']
  #allocation1 [shape = 'u32[144,128]{1,0:T(1,128)}', space=vmem, size = 0x12000, scoped, tag = 'internal scratch']
  #allocation2 [shape = 'f32[128,1]{1,0:T(8,128)}', space=vmem, size = 0x10000, scoped, tag = 'scratch operand']
  #allocation3 [shape = 'f32[128,1]{1,0:T(8,128)}', space=vmem, size = 0x10000, scoped, tag = 'scratch operand']
  #allocation4 [shape = 'f32[128,64]{1,0:T(8,128)}', space=vmem, size = 0x10000, scoped, tag = 'scratch operand']
  #allocation5 [shape = 'f32[1,1]{1,0:T(1,128)S(6)}', space=smem, size = 0x200, scoped, tag = 'scoped memory for tpu_custom_call.1']
  %s0 = inlined_call_operand.<no memory space> [shape: f32[1,1], index: 0, kind: input, shape index: {}]
  %s1 = inlined_call_operand.vmem [shape: f32[2,256,8], index: 1, kind: input, shape index: {}]
  %s2 = inlined_call_operand.vmem [shape: f32[2,8,256], index: 2, kind: input, shape index: {}]
  %s3 = inlined_call_operand.vmem [shape: f32[2,64,256], index: 3, kind: input, shape index: {}]
  %s4 = inlined_call_operand.vmem [shape: f32[2,64,256], index: 4, kind: input, shape index: {}]
  %s5 = inlined_call_operand.hbm [shape: f32[2,64,256], index: 5, kind: output, shape index: {}]
  %s6 = sld [smem:[#allocation0]]
  $region137: #{tpu_custom_call.1} parent=0
    _
  %s8 = ssub.s32 1, %s6
  %s9 = scalar_select 0, %s8, %s6
  %10 = sst [smem:[#allocation5]] %s0
  $region1: #{tpu_custom_call.1} parent=0
    #allocation6 [shape = 'u8[65536]{0}', space=vmem, size = 0x10000, scoped, tag = 'input window, operand 3']
    #allocation7 [shape = 'u8[65536]{0}', space=vmem, size = 0x10000, scoped, tag = 'input window, operand 4']
    #allocation8 [shape = 'u8[65536]{0}', space=vmem, size = 0x10000, scoped, tag = 'output window, operand 0']
    #allocation9 [shape = 's32[2]{0}', space=sflag, size = 0x8, scoped, tag = 'scoped memory for tpu_custom_call.1']
    %11 = vsyncpa [#allocation9], 0
    %s12 = scalar_lea.sflag [#allocation9], 1
    %13 = vsyncpa %s12, 0
    loop: start=0, step=1, limit=10
    $region2: #{tpu_custom_call.1} parent=1 // loop_pre_header
      _
    $region3: #{tpu_custom_call.1} parent=1 // loop_header
      %s15 = sphi 0, %s19
      %p16 = scmp.ge.s32.totalorder %s15, 10
      %s22 = sphi 0, %s41
      %s23 = sphi 0, %s37
      %s24 = sphi 0, %s33
      %s25 = sphi 0, %s22
      %s26 = sphi 0, %s23
      %s27 = sphi 0, %s24
      %s28 = sphi 0, %s25
      %s29 = sphi 0, %s26
      %s30 = sphi 0, %s27
      %s42 = sphi 0, %s42
      %s44 = sphi 0, %s42
      %s45 = sphi 0, %s44
      %s59 = sphi 0, %s45
      %s67 = sphi 0, %s69
      %s70 = sphi 0, %s67
      %s71 = sphi 0, %s70
      %s87 = sphi 0, %s71
      %s95 = sphi 0, %s97
      %s98 = sphi 0, %s95
      %s99 = sphi 0, %s98
      %s115 = sphi 0, %s99
      %s123 = sphi 0, %s125
      %s126 = sphi 0, %s123
      %s127 = sphi 0, %s126
      %s143 = sphi 0, %s127
      %s151 = sphi 0, %s153
      %s154 = sphi 0, %s151
      %s155 = sphi 0, %s154
      %s171 = sphi 0, %s155
      %s179 = sphi 0, %s181
      %s182 = sphi 0, %s179
      %s183 = sphi 0, %s182
      %s199 = sphi 0, %s183
    $region4: #{tpu_custom_call.1} parent=1 // loop_header_branch
      %18 = sbr.rel (%p16) target = $region8
    $region5: #{tpu_custom_call.1} parent=1 // loop_body
      %s20 = ssub.s32 %s15, 1
      %s21 = ssub.s32 %s15, 2
      %s31 = sadd.s32 1, %s24
      %p32 = scmp.ge.s32.totalorder %s31, 2
      %s33 = scalar_select %p32, 0, %s31
      %s34 = sadd.s32 1, %s23
      %s35 = scalar_select %p32, %s34, %s23
      %p36 = scmp.ge.s32.totalorder %s35, 2
      %s37 = scalar_select %p36, 0, %s35
      %s38 = sadd.s32 1, %s22
      %s39 = scalar_select %p36, %s38, %s22
      %p40 = scmp.ge.s32.totalorder %s39, 2
      %s41 = scalar_select %p40, 0, %s39
      %s43 = sadd.s32 %s42, 1
      %p46 = scmp.eq.s32.totalorder %s15, 7
      %p47 = scmp.ne.s32.totalorder %s42, %s44
      %p48 = scmp.eq.s32.totalorder %s15, 0
      %p49 = por %p47, %p48
      %p50 = scmp.ne.s32.totalorder %s42, %s44
      %p51 = scmp.eq.s32.totalorder %s20, 7
      %p52 = por %p50, %p51
      %p53 = scmp.ne.s32.totalorder %s44, %s45
      %p54 = scmp.eq.s32.totalorder %s20, 0
      %p55 = por %p53, %p54
      %p56 = scmp.ne.s32.totalorder %s44, %s45
      %p57 = scmp.eq.s32.totalorder %s21, 7
      %p58 = por %p56, %p57
      %p60 = scmp.ne.s32.totalorder %s45, %s59
      %p61 = scmp.eq.s32.totalorder %s21, 0
      %p62 = por %p60, %p61
      %s63 = ssub.s32 %s22, %s41
      %s64 = ssub.s32 %s23, %s37
      %s65 = sor.u32 %s63, %s64
      %p66 = scmp.eq.s32.totalorder %s65, 0
      %s68 = sadd.s32 %s67, 1
      %s69 = scalar_select %p66, %s67, %s68
      %p72 = pneg %p66
      %p73 = scmp.eq.s32.totalorder %s15, 7
      %p74 = por %p72, %p73
      %p75 = scmp.ne.s32.totalorder %s67, %s70
      %p76 = scmp.eq.s32.totalorder %s15, 0
      %p77 = por %p75, %p76
      %p78 = scmp.ne.s32.totalorder %s67, %s70
      %p79 = scmp.eq.s32.totalorder %s20, 7
      %p80 = por %p78, %p79
      %p81 = scmp.ne.s32.totalorder %s70, %s71
      %p82 = scmp.eq.s32.totalorder %s20, 0
      %p83 = por %p81, %p82
      %p84 = scmp.ne.s32.totalorder %s70, %s71
      %p85 = scmp.eq.s32.totalorder %s21, 7
      %p86 = por %p84, %p85
      %p88 = scmp.ne.s32.totalorder %s71, %s87
      %p89 = scmp.eq.s32.totalorder %s21, 0
      %p90 = por %p88, %p89
      %s91 = ssub.s32 %s22, %s41
      %s92 = ssub.s32 %s24, %s33
      %s93 = sor.u32 %s91, %s92
      %p94 = scmp.eq.s32.totalorder %s93, 0
      %s96 = sadd.s32 %s95, 1
      %s97 = scalar_select %p94, %s95, %s96
      %p100 = pneg %p94
      %p101 = scmp.eq.s32.totalorder %s15, 7
      %p102 = por %p100, %p101
      %p103 = scmp.ne.s32.totalorder %s95, %s98
      %p104 = scmp.eq.s32.totalorder %s15, 0
      %p105 = por %p103, %p104
      %p106 = scmp.ne.s32.totalorder %s95, %s98
      %p107 = scmp.eq.s32.totalorder %s20, 7
      %p108 = por %p106, %p107
      %p109 = scmp.ne.s32.totalorder %s98, %s99
      %p110 = scmp.eq.s32.totalorder %s20, 0
      %p111 = por %p109, %p110
      %p112 = scmp.ne.s32.totalorder %s98, %s99
      %p113 = scmp.eq.s32.totalorder %s21, 7
      %p114 = por %p112, %p113
      %p116 = scmp.ne.s32.totalorder %s99, %s115
      %p117 = scmp.eq.s32.totalorder %s21, 0
      %p118 = por %p116, %p117
      %s119 = ssub.s32 %s22, %s41
      %s120 = ssub.s32 %s24, %s33
      %s121 = sor.u32 %s119, %s120
      %p122 = scmp.eq.s32.totalorder %s121, 0
      %s124 = sadd.s32 %s123, 1
      %s125 = scalar_select %p122, %s123, %s124
      %p128 = pneg %p122
      %p129 = scmp.eq.s32.totalorder %s15, 7
      %p130 = por %p128, %p129
      %p131 = scmp.ne.s32.totalorder %s123, %s126
      %p132 = scmp.eq.s32.totalorder %s15, 0
      %p133 = por %p131, %p132
      %p134 = scmp.ne.s32.totalorder %s123, %s126
      %p135 = scmp.eq.s32.totalorder %s20, 7
      %p136 = por %p134, %p135
      %p137 = scmp.ne.s32.totalorder %s126, %s127
      %p138 = scmp.eq.s32.totalorder %s20, 0
      %p139 = por %p137, %p138
      %p140 = scmp.ne.s32.totalorder %s126, %s127
      %p141 = scmp.eq.s32.totalorder %s21, 7
      %p142 = por %p140, %p141
      %p144 = scmp.ne.s32.totalorder %s127, %s143
      %p145 = scmp.eq.s32.totalorder %s21, 0
      %p146 = por %p144, %p145
      %s147 = ssub.s32 %s22, %s41
      %s148 = ssub.s32 %s23, %s37
      %s149 = sor.u32 %s147, %s148
      %p150 = scmp.eq.s32.totalorder %s149, 0
      %s152 = sadd.s32 %s151, 1
      %s153 = scalar_select %p150, %s151, %s152
      %p156 = pneg %p150
      %p157 = scmp.eq.s32.totalorder %s15, 7
      %p158 = por %p156, %p157
      %p159 = scmp.ne.s32.totalorder %s151, %s154
      %p160 = scmp.eq.s32.totalorder %s15, 0
      %p161 = por %p159, %p160
      %p162 = scmp.ne.s32.totalorder %s151, %s154
      %p163 = scmp.eq.s32.totalorder %s20, 7
      %p164 = por %p162, %p163
      %p165 = scmp.ne.s32.totalorder %s154, %s155
      %p166 = scmp.eq.s32.totalorder %s20, 0
      %p167 = por %p165, %p166
      %p168 = scmp.ne.s32.totalorder %s154, %s155
      %p169 = scmp.eq.s32.totalorder %s21, 7
      %p170 = por %p168, %p169
      %p172 = scmp.ne.s32.totalorder %s155, %s171
      %p173 = scmp.eq.s32.totalorder %s21, 0
      %p174 = por %p172, %p173
      %s175 = ssub.s32 %s22, %s41
      %s176 = ssub.s32 %s23, %s37
      %s177 = sor.u32 %s175, %s176
      %p178 = scmp.eq.s32.totalorder %s177, 0
      %s180 = sadd.s32 %s179, 1
      %s181 = scalar_select %p178, %s179, %s180
      %p184 = pneg %p178
      %p185 = scmp.eq.s32.totalorder %s15, 7
      %p186 = por %p184, %p185
      %p187 = scmp.ne.s32.totalorder %s179, %s182
      %p188 = scmp.eq.s32.totalorder %s15, 0
      %p189 = por %p187, %p188
      %p190 = scmp.ne.s32.totalorder %s179, %s182
      %p191 = scmp.eq.s32.totalorder %s20, 7
      %p192 = por %p190, %p191
      %p193 = scmp.ne.s32.totalorder %s182, %s183
      %p194 = scmp.eq.s32.totalorder %s20, 0
      %p195 = por %p193, %p194
      %p196 = scmp.ne.s32.totalorder %s182, %s183
      %p197 = scmp.eq.s32.totalorder %s21, 7
      %p198 = por %p196, %p197
      %p200 = scmp.ne.s32.totalorder %s183, %s199
      %p201 = scmp.eq.s32.totalorder %s21, 0
      %p202 = por %p200, %p201
      %p203 = scmp.le.s32.totalorder 1, %s15
      %p204 = scmp.lt.s32.totalorder %s15, 9
      %p205 = pnand %p203, %p204
      %p206 = pneg %p205
      // Predicated region
      $region9: #{tpu_custom_call.1} parent=5 // pred_check
        _
      $region10: #{tpu_custom_call.1} parent=5 // pred_check_branch
        %208 = sbr.rel (%p205) target = $region12
      $region11: #{tpu_custom_call.1} parent=5 // pred_region
        %s209 = ssub.s32 %s15, 1
        // Predicated region
        $region13: #{tpu_custom_call.1} parent=11 // pred_check
          %p210 = pneg %p55
        $region14: #{tpu_custom_call.1} parent=11 // pred_check_branch
          %212 = sbr.rel (%p210) target = $region16
        $region15: #{tpu_custom_call.1} parent=11 // pred_region
          _
        $region16: #{tpu_custom_call.1} parent=11 // pred_fallthru
          _
      $region12: #{tpu_custom_call.1} parent=5 // pred_fallthru
        _
      %p213 = scmp.lt.s32.totalorder %s15, 8
      // Predicated region
      $region17: #{tpu_custom_call.1} parent=5 // pred_check
        %p214 = pneg %p213
      $region18: #{tpu_custom_call.1} parent=5 // pred_check_branch
        %216 = sbr.rel (%p214) target = $region20
      $region19: #{tpu_custom_call.1} parent=5 // pred_region
        // Predicated region
        $region21: #{tpu_custom_call.1} parent=19 // pred_check
          %p217 = pneg %p77
        $region22: #{tpu_custom_call.1} parent=19 // pred_check_branch
          %219 = sbr.rel (%p217) target = $region24
        $region23: #{tpu_custom_call.1} parent=19 // pred_region
          %s220 = smul.u32 16, %s23
          %p221 = scmp.lt.s32.totalorder %s22, 1
          %s222 = scalar_select %p221, %s22, 1
          %p223 = scmp.lt.s32.totalorder %s220, 31
          %s224 = scalar_select %p223, %s220, 31
          %s225 = smul.addr %s222, 32
          %s226 = sadd.s32 %s224, %s225
          %s227 = smul.addr %s226, 8
          %s228 = scalar_lea.vmem %s1, %s227
          %s229 = smul.u32 16, %s23
        $region24: #{tpu_custom_call.1} parent=19 // pred_fallthru
          _
        // Predicated region
        $region25: #{tpu_custom_call.1} parent=19 // pred_check
          %p230 = pneg %p105
        $region26: #{tpu_custom_call.1} parent=19 // pred_check_branch
          %232 = sbr.rel (%p230) target = $region28
        $region27: #{tpu_custom_call.1} parent=19 // pred_region
          %p233 = scmp.lt.s32.totalorder %s22, 1
          %s234 = scalar_select %p233, %s22, 1
          %p235 = scmp.lt.s32.totalorder %s24, 1
          %s236 = scalar_select %p235, %s24, 1
          %s237 = smul.addr %s234, 2
          %s238 = sadd.s32 %s236, %s237
          %s239 = smul.addr %s238, 8
          %s240 = scalar_lea.vmem %s2, %s239
        $region28: #{tpu_custom_call.1} parent=19 // pred_fallthru
          _
        // Predicated region
        $region29: #{tpu_custom_call.1} parent=19 // pred_check
          %p241 = pneg %p133
        $region30: #{tpu_custom_call.1} parent=19 // pred_check_branch
          %243 = sbr.rel (%p241) target = $region32
        $region31: #{tpu_custom_call.1} parent=19 // pred_region
          %s244 = sand.u32 %s123, 1
          %s245 = sand.u32 %s123, 1
          %s246 = smul.addr %s245, 64
          %s247 = scalar_lea.vmem [#allocation6], %s246
          %s248 = smul.addr %s22, 16
          %s249 = sadd.s32 %s24, %s248
          %s250 = smul.addr %s249, 8
          %s251 = scalar_lea.vmem %s3, %s250
          // Predicated region
          $region33: #{tpu_custom_call.1} parent=31 // pred_check
            _
          $region34: #{tpu_custom_call.1} parent=31 // pred_check_branch
            %253 = sbr.rel (0) target = $region36
          $region35: #{tpu_custom_call.1} parent=31 // pred_region
            // Predicated region
            $region37: #{tpu_custom_call.1} parent=35 // pred_check
              _
            $region38: #{tpu_custom_call.1} parent=35 // pred_check_branch
              %255 = sbr.rel (0) target = $region40
            $region39: #{tpu_custom_call.1} parent=35 // pred_region
              // Predicated region
              $region52: #{tpu_custom_call.1} parent=39 // pred_check
                _
              $region53: #{tpu_custom_call.1} parent=39 // pred_check_branch
                %285 = sbr.rel (0) target = $region55
              $region54: #{tpu_custom_call.1} parent=39 // pred_region
                loop: start=0, step=1, limit=1
                $region56: #{tpu_custom_call.1} parent=54 // loop_pre_header
                  _
                $region57: #{tpu_custom_call.1} parent=54 // loop_header
                  %s287 = sphi 0, %s291
                  %p288 = scmp.ge.s32.totalorder %s287, 1
                  %s292 = sphi %s251, %s251
                  %s293 = sphi %s247, %s247
                $region58: #{tpu_custom_call.1} parent=54 // loop_header_branch
                  %290 = sbr.rel (%p288) target = $region62
                $region59: #{tpu_custom_call.1} parent=54 // loop_body
                  %v294 = vld [vmem:[%s292] sm:$0xff]
                  %295 = vst [vmem:[%s293] sm:$0xff] %v294
                  %v296 = vld [vmem:[%s292 + $0x10] sm:$0xff]
                  %297 = vst [vmem:[%s293 + $0x8] sm:$0xff] %v296
                  %v298 = vld [vmem:[%s292 + $0x20] sm:$0xff]
                  %299 = vst [vmem:[%s293 + $0x10] sm:$0xff] %v298
                  %v300 = vld [vmem:[%s292 + $0x30] sm:$0xff]
                  %301 = vst [vmem:[%s293 + $0x18] sm:$0xff] %v300
                  %v302 = vld [vmem:[%s292 + $0x40] sm:$0xff]
                  %303 = vst [vmem:[%s293 + $0x20] sm:$0xff] %v302
                  %v304 = vld [vmem:[%s292 + $0x50] sm:$0xff]
                  %305 = vst [vmem:[%s293 + $0x28] sm:$0xff] %v304
                  %v306 = vld [vmem:[%s292 + $0x60] sm:$0xff]
                  %307 = vst [vmem:[%s293 + $0x30] sm:$0xff] %v306
                  %v308 = vld [vmem:[%s292 + $0x70] sm:$0xff]
                  %309 = vst [vmem:[%s293 + $0x38] sm:$0xff] %v308
                $region60: #{tpu_custom_call.1} parent=54 // loop_footer
                  %s291 = sadd.s32 1, %s287
                $region61: #{tpu_custom_call.1} parent=54 // loop_footer_branch
                  %286 = sbr.rel target = $region57
                $region62: #{tpu_custom_call.1} parent=54 // loop_exit
                  _
              $region55: #{tpu_custom_call.1} parent=39 // pred_fallthru
                _
              // Predicated region
              $region63: #{tpu_custom_call.1} parent=39 // pred_check
                _
              $region64: #{tpu_custom_call.1} parent=39 // pred_check_branch
                %311 = sbr.rel target = $region66
              $region65: #{tpu_custom_call.1} parent=39 // pred_region
                _
              $region66: #{tpu_custom_call.1} parent=39 // pred_fallthru
                _
            $region40: #{tpu_custom_call.1} parent=35 // pred_fallthru
              _
            // Predicated region
            $region41: #{tpu_custom_call.1} parent=35 // pred_check
              _
            $region42: #{tpu_custom_call.1} parent=35 // pred_check_branch
              %257 = sbr.rel target = $region44
            $region43: #{tpu_custom_call.1} parent=35 // pred_region
              %s259 = ssub.s32 256, 1
              loop: start=0, step=1, limit=1
              $region45: #{tpu_custom_call.1} parent=43 // loop_pre_header
                _
              $region46: #{tpu_custom_call.1} parent=43 // loop_header
                %s261 = sphi 0, %s265
                %p262 = scmp.ge.s32.totalorder %s261, 1
                %s266 = sphi %s251, %s251
                %s267 = sphi %s247, %s247
              $region47: #{tpu_custom_call.1} parent=43 // loop_header_branch
                %264 = sbr.rel (%p262) target = $region51
              $region48: #{tpu_custom_call.1} parent=43 // loop_body
                %v268 = vld [vmem:[%s266] sm:%s259]
                %269 = vst [vmem:[%s267] sm:%s259] %v268
                %v270 = vld [vmem:[%s266 + $0x10] sm:%s259]
                %271 = vst [vmem:[%s267 + $0x8] sm:%s259] %v270
                %v272 = vld [vmem:[%s266 + $0x20] sm:%s259]
                %273 = vst [vmem:[%s267 + $0x10] sm:%s259] %v272
                %v274 = vld [vmem:[%s266 + $0x30] sm:%s259]
                %275 = vst [vmem:[%s267 + $0x18] sm:%s259] %v274
                %v276 = vld [vmem:[%s266 + $0x40] sm:%s259]
                %277 = vst [vmem:[%s267 + $0x20] sm:%s259] %v276
                %v278 = vld [vmem:[%s266 + $0x50] sm:%s259]
                %279 = vst [vmem:[%s267 + $0x28] sm:%s259] %v278
                %v280 = vld [vmem:[%s266 + $0x60] sm:%s259]
                %281 = vst [vmem:[%s267 + $0x30] sm:%s259] %v280
                %v282 = vld [vmem:[%s266 + $0x70] sm:%s259]
                %283 = vst [vmem:[%s267 + $0x38] sm:%s259] %v282
              $region49: #{tpu_custom_call.1} parent=43 // loop_footer
                %s265 = sadd.s32 1, %s261
              $region50: #{tpu_custom_call.1} parent=43 // loop_footer_branch
                %260 = sbr.rel target = $region46
              $region51: #{tpu_custom_call.1} parent=43 // loop_exit
                _
            $region44: #{tpu_custom_call.1} parent=35 // pred_fallthru
              _
          $region36: #{tpu_custom_call.1} parent=31 // pred_fallthru
            _
          %312 = vnop
        $region32: #{tpu_custom_call.1} parent=19 // pred_fallthru
          _
        // Predicated region
        $region67: #{tpu_custom_call.1} parent=19 // pred_check
          %p313 = pneg %p161
        $region68: #{tpu_custom_call.1} parent=19 // pred_check_branch
          %315 = sbr.rel (%p313) target = $region70
        $region69: #{tpu_custom_call.1} parent=19 // pred_region
          %s316 = sand.u32 %s151, 1
          %s317 = sand.u32 %s151, 1
          %s318 = smul.addr %s317, 64
          %s319 = scalar_lea.vmem [#allocation7], %s318
          %s320 = smul.addr %s22, 16
          %s321 = sadd.s32 %s23, %s320
          %s322 = smul.addr %s321, 8
          %s323 = scalar_lea.vmem %s4, %s322
          // Predicated region
          $region71: #{tpu_custom_call.1} parent=69 // pred_check
            _
          $region72: #{tpu_custom_call.1} parent=69 // pred_check_branch
            %325 = sbr.rel (0) target = $region74
          $region73: #{tpu_custom_call.1} parent=69 // pred_region
            // Predicated region
            $region75: #{tpu_custom_call.1} parent=73 // pred_check
              _
            $region76: #{tpu_custom_call.1} parent=73 // pred_check_branch
              %327 = sbr.rel (0) target = $region78
            $region77: #{tpu_custom_call.1} parent=73 // pred_region
              // Predicated region
              $region90: #{tpu_custom_call.1} parent=77 // pred_check
                _
              $region91: #{tpu_custom_call.1} parent=77 // pred_check_branch
                %357 = sbr.rel (0) target = $region93
              $region92: #{tpu_custom_call.1} parent=77 // pred_region
                loop: start=0, step=1, limit=1
                $region94: #{tpu_custom_call.1} parent=92 // loop_pre_header
                  _
                $region95: #{tpu_custom_call.1} parent=92 // loop_header
                  %s359 = sphi 0, %s363
                  %p360 = scmp.ge.s32.totalorder %s359, 1
                  %s364 = sphi %s323, %s323
                  %s365 = sphi %s319, %s319
                $region96: #{tpu_custom_call.1} parent=92 // loop_header_branch
                  %362 = sbr.rel (%p360) target = $region100
                $region97: #{tpu_custom_call.1} parent=92 // loop_body
                  %v366 = vld [vmem:[%s364] sm:$0xff]
                  %367 = vst [vmem:[%s365] sm:$0xff] %v366
                  %v368 = vld [vmem:[%s364 + $0x10] sm:$0xff]
                  %369 = vst [vmem:[%s365 + $0x8] sm:$0xff] %v368
                  %v370 = vld [vmem:[%s364 + $0x20] sm:$0xff]
                  %371 = vst [vmem:[%s365 + $0x10] sm:$0xff] %v370
                  %v372 = vld [vmem:[%s364 + $0x30] sm:$0xff]
                  %373 = vst [vmem:[%s365 + $0x18] sm:$0xff] %v372
                  %v374 = vld [vmem:[%s364 + $0x40] sm:$0xff]
                  %375 = vst [vmem:[%s365 + $0x20] sm:$0xff] %v374
                  %v376 = vld [vmem:[%s364 + $0x50] sm:$0xff]
                  %377 = vst [vmem:[%s365 + $0x28] sm:$0xff] %v376
                  %v378 = vld [vmem:[%s364 + $0x60] sm:$0xff]
                  %379 = vst [vmem:[%s365 + $0x30] sm:$0xff] %v378
                  %v380 = vld [vmem:[%s364 + $0x70] sm:$0xff]
                  %381 = vst [vmem:[%s365 + $0x38] sm:$0xff] %v380
                $region98: #{tpu_custom_call.1} parent=92 // loop_footer
                  %s363 = sadd.s32 1, %s359
                $region99: #{tpu_custom_call.1} parent=92 // loop_footer_branch
                  %358 = sbr.rel target = $region95
                $region100: #{tpu_custom_call.1} parent=92 // loop_exit
                  _
              $region93: #{tpu_custom_call.1} parent=77 // pred_fallthru
                _
              // Predicated region
              $region101: #{tpu_custom_call.1} parent=77 // pred_check
                _
              $region102: #{tpu_custom_call.1} parent=77 // pred_check_branch
                %383 = sbr.rel target = $region104
              $region103: #{tpu_custom_call.1} parent=77 // pred_region
                _
              $region104: #{tpu_custom_call.1} parent=77 // pred_fallthru
                _
            $region78: #{tpu_custom_call.1} parent=73 // pred_fallthru
              _
            // Predicated region
            $region79: #{tpu_custom_call.1} parent=73 // pred_check
              _
            $region80: #{tpu_custom_call.1} parent=73 // pred_check_branch
              %329 = sbr.rel target = $region82
            $region81: #{tpu_custom_call.1} parent=73 // pred_region
              %s331 = ssub.s32 256, 1
              loop: start=0, step=1, limit=1
              $region83: #{tpu_custom_call.1} parent=81 // loop_pre_header
                _
              $region84: #{tpu_custom_call.1} parent=81 // loop_header
                %s333 = sphi 0, %s337
                %p334 = scmp.ge.s32.totalorder %s333, 1
                %s338 = sphi %s323, %s323
                %s339 = sphi %s319, %s319
              $region85: #{tpu_custom_call.1} parent=81 // loop_header_branch
                %336 = sbr.rel (%p334) target = $region89
              $region86: #{tpu_custom_call.1} parent=81 // loop_body
                %v340 = vld [vmem:[%s338] sm:%s331]
                %341 = vst [vmem:[%s339] sm:%s331] %v340
                %v342 = vld [vmem:[%s338 + $0x10] sm:%s331]
                %343 = vst [vmem:[%s339 + $0x8] sm:%s331] %v342
                %v344 = vld [vmem:[%s338 + $0x20] sm:%s331]
                %345 = vst [vmem:[%s339 + $0x10] sm:%s331] %v344
                %v346 = vld [vmem:[%s338 + $0x30] sm:%s331]
                %347 = vst [vmem:[%s339 + $0x18] sm:%s331] %v346
                %v348 = vld [vmem:[%s338 + $0x40] sm:%s331]
                %349 = vst [vmem:[%s339 + $0x20] sm:%s331] %v348
                %v350 = vld [vmem:[%s338 + $0x50] sm:%s331]
                %351 = vst [vmem:[%s339 + $0x28] sm:%s331] %v350
                %v352 = vld [vmem:[%s338 + $0x60] sm:%s331]
                %353 = vst [vmem:[%s339 + $0x30] sm:%s331] %v352
                %v354 = vld [vmem:[%s338 + $0x70] sm:%s331]
                %355 = vst [vmem:[%s339 + $0x38] sm:%s331] %v354
              $region87: #{tpu_custom_call.1} parent=81 // loop_footer
                %s337 = sadd.s32 1, %s333
              $region88: #{tpu_custom_call.1} parent=81 // loop_footer_branch
                %332 = sbr.rel target = $region84
              $region89: #{tpu_custom_call.1} parent=81 // loop_exit
                _
            $region82: #{tpu_custom_call.1} parent=73 // pred_fallthru
              _
          $region74: #{tpu_custom_call.1} parent=69 // pred_fallthru
            _
          %384 = vnop
        $region70: #{tpu_custom_call.1} parent=19 // pred_fallthru
          _
      $region20: #{tpu_custom_call.1} parent=5 // pred_fallthru
        _
      %p385 = scmp.le.s32.totalorder 1, %s15
      %p386 = scmp.lt.s32.totalorder %s15, 9
      %p387 = pnand %p385, %p386
      %p388 = pneg %p387
      // Predicated region
      $region105: #{tpu_custom_call.1} parent=5 // pred_check
        _
      $region106: #{tpu_custom_call.1} parent=5 // pred_check_branch
        %390 = sbr.rel (%p387) target = $region108
      $region107: #{tpu_custom_call.1} parent=5 // pred_region
        %s391 = ssub.s32 %s15, 1
        %s392 = sand.u32 %s126, 1
        %s393 = sand.u32 %s126, 1
        %s394 = smul.addr %s393, 64
        %s395 = scalar_lea.vmem [#allocation6], %s394
        // Predicated region
        $region109: #{tpu_custom_call.1} parent=107 // pred_check
          %p396 = pneg %p139
        $region110: #{tpu_custom_call.1} parent=107 // pred_check_branch
          %398 = sbr.rel (%p396) target = $region112
        $region111: #{tpu_custom_call.1} parent=107 // pred_region
          _
        $region112: #{tpu_custom_call.1} parent=107 // pred_fallthru
          _
        %s399 = sand.u32 %s154, 1
        %s400 = sand.u32 %s154, 1
        %s401 = smul.addr %s400, 64
        %s402 = scalar_lea.vmem [#allocation7], %s401
        // Predicated region
        $region113: #{tpu_custom_call.1} parent=107 // pred_check
          %p403 = pneg %p167
        $region114: #{tpu_custom_call.1} parent=107 // pred_check_branch
          %405 = sbr.rel (%p403) target = $region116
        $region115: #{tpu_custom_call.1} parent=107 // pred_region
          _
        $region116: #{tpu_custom_call.1} parent=107 // pred_fallthru
          _
        %p406 = pneg %p55
        %p407 = pneg %p52
        %s408 = smul.u32 16, %s26
        %p409 = scmp.lt.s32.totalorder %s25, 1
        %s410 = scalar_select %p409, %s25, 1
        %p411 = scmp.lt.s32.totalorder %s408, 31
        %s412 = scalar_select %p411, %s408, 31
        %s413 = smul.addr %s410, 32
        %s414 = sadd.s32 %s412, %s413
        %s415 = smul.addr %s414, 8
        %s416 = scalar_lea.vmem %s1, %s415
        %p417 = pneg %p83
        %p418 = pneg %p80
        %p419 = scmp.lt.s32.totalorder %s25, 1
        %s420 = scalar_select %p419, %s25, 1
        %p421 = scmp.lt.s32.totalorder %s27, 1
        %s422 = scalar_select %p421, %s27, 1
        %s423 = smul.addr %s420, 2
        %s424 = sadd.s32 %s422, %s423
        %s425 = smul.addr %s424, 8
        %s426 = scalar_lea.vmem %s2, %s425
        %p427 = pneg %p111
        %p428 = pneg %p108
        %s429 = sand.u32 %s126, 1
        %s430 = sand.u32 %s126, 1
        %s431 = smul.addr %s430, 64
        %s432 = scalar_lea.vmem [#allocation6], %s431
        %p433 = pneg %p139
        %p434 = pneg %p136
        %s435 = sand.u32 %s154, 1
        %s436 = sand.u32 %s154, 1
        %s437 = smul.addr %s436, 64
        %s438 = scalar_lea.vmem [#allocation7], %s437
        %p439 = pneg %p167
        %p440 = pneg %p164
        %p441 = pneg %p195
        %p442 = pneg %p192
        %s443 = sand.u32 %s182, 1
        %s444 = scalar_lea.sflag [#allocation9], %s443
        %s445 = sand.u32 %s182, 1
        %s446 = smul.addr %s445, 64
        %s447 = scalar_lea.vmem [#allocation8], %s446
        %s448 = smul.u32 16, %s26
        %p449 = scmp.lt.s32.totalorder %s25, 1
        %s450 = scalar_select %p449, %s25, 1
        %p451 = scmp.lt.s32.totalorder %s448, 31
        %s452 = scalar_select %p451, %s448, 31
        %s453 = smul.addr %s450, 32
        %s454 = sadd.s32 %s452, %s453
        %s455 = smul.addr %s454, 8
        %s456 = scalar_lea.vmem %s1, %s455
        %s457 = smul.u32 16, %s26
        %p458 = scmp.lt.s32.totalorder %s25, 1
        %s459 = scalar_select %p458, %s25, 1
        %p460 = scmp.lt.s32.totalorder %s27, 1
        %s461 = scalar_select %p460, %s27, 1
        %s462 = smul.addr %s459, 2
        %s463 = sadd.s32 %s461, %s462
        %s464 = smul.addr %s463, 8
        %s465 = scalar_lea.vmem %s2, %s464
        %p466 = scmp.eq.s32.totalorder %s27, 0
        // Predicated region
        $region117: #{tpu_custom_call.1} parent=107 // pred_check
          %p467 = pneg %p466
        $region118: #{tpu_custom_call.1} parent=107 // pred_check_branch
          %469 = sbr.rel (%p467) target = $region120
        $region119: #{tpu_custom_call.1} parent=107 // pred_region
          %vm470 = vcmask 7168
          %471 = vst.msk [vmem:[#allocation2] sm:$0xff] %vm470, -inf
          %472 = vst.msk [vmem:[#allocation2 + $0x8] sm:$0xff] %vm470, -inf
          %473 = vst.msk [vmem:[#allocation2 + $0x10] sm:$0xff] %vm470, -inf
          %474 = vst.msk [vmem:[#allocation2 + $0x18] sm:$0xff] %vm470, -inf
          %475 = vst.msk [vmem:[#allocation2 + $0x20] sm:$0xff] %vm470, -inf
          %476 = vst.msk [vmem:[#allocation2 + $0x28] sm:$0xff] %vm470, -inf
          %477 = vst.msk [vmem:[#allocation2 + $0x30] sm:$0xff] %vm470, -inf
          %478 = vst.msk [vmem:[#allocation2 + $0x38] sm:$0xff] %vm470, -inf
          %479 = vst.msk [vmem:[#allocation2 + $0x40] sm:$0xff] %vm470, -inf
          %480 = vst.msk [vmem:[#allocation2 + $0x48] sm:$0xff] %vm470, -inf
          %481 = vst.msk [vmem:[#allocation2 + $0x50] sm:$0xff] %vm470, -inf
          %482 = vst.msk [vmem:[#allocation2 + $0x58] sm:$0xff] %vm470, -inf
          %483 = vst.msk [vmem:[#allocation2 + $0x60] sm:$0xff] %vm470, -inf
          %484 = vst.msk [vmem:[#allocation2 + $0x68] sm:$0xff] %vm470, -inf
          %485 = vst.msk [vmem:[#allocation2 + $0x70] sm:$0xff] %vm470, -inf
          %486 = vst.msk [vmem:[#allocation2 + $0x78] sm:$0xff] %vm470, -inf
          %487 = vst.msk [vmem:[#allocation3] sm:$0xff] %vm470, 0.0
          %488 = vst.msk [vmem:[#allocation3 + $0x8] sm:$0xff] %vm470, 0.0
          %489 = vst.msk [vmem:[#allocation3 + $0x10] sm:$0xff] %vm470, 0.0
          %490 = vst.msk [vmem:[#allocation3 + $0x18] sm:$0xff] %vm470, 0.0
          %491 = vst.msk [vmem:[#allocation3 + $0x20] sm:$0xff] %vm470, 0.0
          %492 = vst.msk [vmem:[#allocation3 + $0x28] sm:$0xff] %vm470, 0.0
          %493 = vst.msk [vmem:[#allocation3 + $0x30] sm:$0xff] %vm470, 0.0
          %494 = vst.msk [vmem:[#allocation3 + $0x38] sm:$0xff] %vm470, 0.0
          %495 = vst.msk [vmem:[#allocation3 + $0x40] sm:$0xff] %vm470, 0.0
          %496 = vst.msk [vmem:[#allocation3 + $0x48] sm:$0xff] %vm470, 0.0
          %497 = vst.msk [vmem:[#allocation3 + $0x50] sm:$0xff] %vm470, 0.0
          %498 = vst.msk [vmem:[#allocation3 + $0x58] sm:$0xff] %vm470, 0.0
          %499 = vst.msk [vmem:[#allocation3 + $0x60] sm:$0xff] %vm470, 0.0
          %500 = vst.msk [vmem:[#allocation3 + $0x68] sm:$0xff] %vm470, 0.0
          %501 = vst.msk [vmem:[#allocation3 + $0x70] sm:$0xff] %vm470, 0.0
          %502 = vst.msk [vmem:[#allocation3 + $0x78] sm:$0xff] %vm470, 0.0
          %vm503 = vcmask 523264
          %504 = vst.msk [vmem:[#allocation4] sm:$0xff] %vm503, 0.0
          %505 = vst.msk [vmem:[#allocation4 + $0x8] sm:$0xff] %vm503, 0.0
          %506 = vst.msk [vmem:[#allocation4 + $0x10] sm:$0xff] %vm503, 0.0
          %507 = vst.msk [vmem:[#allocation4 + $0x18] sm:$0xff] %vm503, 0.0
          %508 = vst.msk [vmem:[#allocation4 + $0x20] sm:$0xff] %vm503, 0.0
          %509 = vst.msk [vmem:[#allocation4 + $0x28] sm:$0xff] %vm503, 0.0
          %510 = vst.msk [vmem:[#allocation4 + $0x30] sm:$0xff] %vm503, 0.0
          %511 = vst.msk [vmem:[#allocation4 + $0x38] sm:$0xff] %vm503, 0.0
          %512 = vst.msk [vmem:[#allocation4 + $0x40] sm:$0xff] %vm503, 0.0
          %513 = vst.msk [vmem:[#allocation4 + $0x48] sm:$0xff] %vm503, 0.0
          %514 = vst.msk [vmem:[#allocation4 + $0x50] sm:$0xff] %vm503, 0.0
          %515 = vst.msk [vmem:[#allocation4 + $0x58] sm:$0xff] %vm503, 0.0
          %516 = vst.msk [vmem:[#allocation4 + $0x60] sm:$0xff] %vm503, 0.0
          %517 = vst.msk [vmem:[#allocation4 + $0x68] sm:$0xff] %vm503, 0.0
          %518 = vst.msk [vmem:[#allocation4 + $0x70] sm:$0xff] %vm503, 0.0
          %519 = vst.msk [vmem:[#allocation4 + $0x78] sm:$0xff] %vm503, 0.0
        $region120: #{tpu_custom_call.1} parent=107 // pred_fallthru
          _
        %v520 = vld [vmem:[%s456] sm:$0xff]
        %v521 = vld [vmem:[%s456 + $0x8] sm:$0xff]
        %v522 = vld [vmem:[%s456 + $0x10] sm:$0xff]
        %v523 = vld [vmem:[%s456 + $0x18] sm:$0xff]
        %v524 = vld [vmem:[%s456 + $0x20] sm:$0xff]
        %v525 = vld [vmem:[%s456 + $0x28] sm:$0xff]
        %v526 = vld [vmem:[%s456 + $0x30] sm:$0xff]
        %v527 = vld [vmem:[%s456 + $0x38] sm:$0xff]
        %v528 = vld [vmem:[%s456 + $0x40] sm:$0xff]
        %v529 = vld [vmem:[%s456 + $0x48] sm:$0xff]
        %v530 = vld [vmem:[%s456 + $0x50] sm:$0xff]
        %v531 = vld [vmem:[%s456 + $0x58] sm:$0xff]
        %v532 = vld [vmem:[%s456 + $0x60] sm:$0xff]
        %v533 = vld [vmem:[%s456 + $0x68] sm:$0xff]
        %v534 = vld [vmem:[%s456 + $0x70] sm:$0xff]
        %v535 = vld [vmem:[%s456 + $0x78] sm:$0xff]
        %v536 = vld [vmem:[%s465] sm:$0xff]
        %vm537 = vcmask 64512
        %v539 = vsel %vm537, %v520, 0
        %v542 = vsel %vm537, %v521, 0
        %v545 = vsel %vm537, %v522, 0
        %v548 = vsel %vm537, %v523, 0
        %v551 = vsel %vm537, %v524, 0
        %v554 = vsel %vm537, %v525, 0
        %v557 = vsel %vm537, %v526, 0
        %v560 = vsel %vm537, %v527, 0
        %v563 = vsel %vm537, %v528, 0
        %v566 = vsel %vm537, %v529, 0
        %v569 = vsel %vm537, %v530, 0
        %v572 = vsel %vm537, %v531, 0
        %v575 = vsel %vm537, %v532, 0
        %v578 = vsel %vm537, %v533, 0
        %v581 = vsel %vm537, %v534, 0
        %v584 = vsel %vm537, %v535, 0
        %586 = vmatprep.subr.mxu0 0.0
        %587 = vmatpush1.msra.mxu0 0.0
        %588 = vmatprep.subr.mxu0 0.0
        %589 = vmatpush1.msra.mxu0 0.0
        %590 = vmatprep.subr.mxu0 0.0
        %591 = vmatpush1.msra.mxu0 0.0
        %592 = vmatprep.subr.mxu0 0.0
        %593 = vmatpush1.msra.mxu0 0.0
        %594 = vmatprep.subr.mxu0 0.0
        %595 = vmatpush1.msra.mxu0 0.0
        %596 = vmatprep.subr.mxu0 0.0
        %597 = vmatpush1.msra.mxu0 0.0
        %598 = vmatprep.subr.mxu0 0.0
        %599 = vmatpush1.msra.mxu0 0.0
        %600 = vmatprep.subr.mxu0 0.0
        %601 = vmatpush1.msra.mxu0 0.0
        %602 = vmatprep.subr.mxu0 0.0
        %603 = vmatpush1.msra.mxu0 0.0
        %604 = vmatprep.subr.mxu0 0.0
        %605 = vmatpush1.msra.mxu0 0.0
        %606 = vmatprep.subr.mxu0 0.0
        %607 = vmatpush1.msra.mxu0 0.0
        %608 = vmatprep.subr.mxu0 0.0
        %609 = vmatpush1.msra.mxu0 0.0
        %610 = vmatprep.subr.mxu0 0.0
        %611 = vmatpush1.msra.mxu0 0.0
        %612 = vmatprep.subr.mxu0 0.0
        %613 = vmatpush1.msra.mxu0 0.0
        %614 = vmatprep.subr.mxu0 0.0
        %615 = vmatpush1.msra.mxu0 0.0
        %616 = vmatprep.subr.mxu0 0.0
        %617 = vmatpush1.msra.mxu0 %v536
        %618 = vmatprep.subr.mxu0 0.0
        %619 = vmatpush2.msra.mxu0 0.0
        %620 = vmatprep.subr.mxu0 0.0
        %621 = vmatpush2.msra.mxu0 0.0
        %622 = vmatprep.subr.mxu0 0.0
        %623 = vmatpush2.msra.mxu0 0.0
        %624 = vmatprep.subr.mxu0 0.0
        %625 = vmatpush2.msra.mxu0 0.0
        %626 = vmatprep.subr.mxu0 0.0
        %627 = vmatpush2.msra.mxu0 0.0
        %628 = vmatprep.subr.mxu0 0.0
        %629 = vmatpush2.msra.mxu0 0.0
        %630 = vmatprep.subr.mxu0 0.0
        %631 = vmatpush2.msra.mxu0 0.0
        %632 = vmatprep.subr.mxu0 0.0
        %633 = vmatpush2.msra.mxu0 0.0
        %634 = vmatprep.subr.mxu0 0.0
        %635 = vmatpush2.msra.mxu0 0.0
        %636 = vmatprep.subr.mxu0 0.0
        %637 = vmatpush2.msra.mxu0 0.0
        %638 = vmatprep.subr.mxu0 0.0
        %639 = vmatpush2.msra.mxu0 0.0
        %640 = vmatprep.subr.mxu0 0.0
        %641 = vmatpush2.msra.mxu0 0.0
        %642 = vmatprep.subr.mxu0 0.0
        %643 = vmatpush2.msra.mxu0 0.0
        %644 = vmatprep.subr.mxu0 0.0
        %645 = vmatpush2.msra.mxu0 0.0
        %646 = vmatprep.subr.mxu0 0.0
        %647 = vmatpush2.msra.mxu0 0.0
        %648 = vmatprep.subr.mxu0 0.0
        %649 = vmatpush2.msra.mxu0 0.0
        %650 = vmatprep.mubr.f32.mxu0 0.0
        %651 = vmatmul.mubr.f32.gmra.mxu0 %v539
        %v652 = vpop.f32.mrf.mxu0
        %v653 = vadd.f32 0.0, %v652
        %v654 = vpop.f32.mrf.mxu0
        %655 = vmatprep.mubr.f32.mxu0 0.0
        %656 = vmatmul.mubr.f32.gmra.mxu0 %v542
        %v657 = vpop.f32.mrf.mxu0
        %v658 = vadd.f32 0.0, %v657
        %v659 = vpop.f32.mrf.mxu0
        %660 = vmatprep.mubr.f32.mxu0 0.0
        %661 = vmatmul.mubr.f32.gmra.mxu0 %v545
        %v662 = vpop.f32.mrf.mxu0
        %v663 = vadd.f32 0.0, %v662
        %v664 = vpop.f32.mrf.mxu0
        %665 = vmatprep.mubr.f32.mxu0 0.0
        %666 = vmatmul.mubr.f32.gmra.mxu0 %v548
        %v667 = vpop.f32.mrf.mxu0
        %v668 = vadd.f32 0.0, %v667
        %v669 = vpop.f32.mrf.mxu0
        %670 = vmatprep.mubr.f32.mxu0 0.0
        %671 = vmatmul.mubr.f32.gmra.mxu0 %v551
        %v672 = vpop.f32.mrf.mxu0
        %v673 = vadd.f32 0.0, %v672
        %v674 = vpop.f32.mrf.mxu0
        %675 = vmatprep.mubr.f32.mxu0 0.0
        %676 = vmatmul.mubr.f32.gmra.mxu0 %v554
        %v677 = vpop.f32.mrf.mxu0
        %v678 = vadd.f32 0.0, %v677
        %v679 = vpop.f32.mrf.mxu0
        %680 = vmatprep.mubr.f32.mxu0 0.0
        %681 = vmatmul.mubr.f32.gmra.mxu0 %v557
        %v682 = vpop.f32.mrf.mxu0
        %v683 = vadd.f32 0.0, %v682
        %v684 = vpop.f32.mrf.mxu0
        %685 = vmatprep.mubr.f32.mxu0 0.0
        %686 = vmatmul.mubr.f32.gmra.mxu0 %v560
        %v687 = vpop.f32.mrf.mxu0
        %v688 = vadd.f32 0.0, %v687
        %v689 = vpop.f32.mrf.mxu0
        %690 = vmatprep.mubr.f32.mxu0 0.0
        %691 = vmatmul.mubr.f32.gmra.mxu0 %v563
        %v692 = vpop.f32.mrf.mxu0
        %v693 = vadd.f32 0.0, %v692
        %v694 = vpop.f32.mrf.mxu0
        %695 = vmatprep.mubr.f32.mxu0 0.0
        %696 = vmatmul.mubr.f32.gmra.mxu0 %v566
        %v697 = vpop.f32.mrf.mxu0
        %v698 = vadd.f32 0.0, %v697
        %v699 = vpop.f32.mrf.mxu0
        %700 = vmatprep.mubr.f32.mxu0 0.0
        %701 = vmatmul.mubr.f32.gmra.mxu0 %v569
        %v702 = vpop.f32.mrf.mxu0
        %v703 = vadd.f32 0.0, %v702
        %v704 = vpop.f32.mrf.mxu0
        %705 = vmatprep.mubr.f32.mxu0 0.0
        %706 = vmatmul.mubr.f32.gmra.mxu0 %v572
        %v707 = vpop.f32.mrf.mxu0
        %v708 = vadd.f32 0.0, %v707
        %v709 = vpop.f32.mrf.mxu0
        %710 = vmatprep.mubr.f32.mxu0 0.0
        %711 = vmatmul.mubr.f32.gmra.mxu0 %v575
        %v712 = vpop.f32.mrf.mxu0
        %v713 = vadd.f32 0.0, %v712
        %v714 = vpop.f32.mrf.mxu0
        %715 = vmatprep.mubr.f32.mxu0 0.0
        %716 = vmatmul.mubr.f32.gmra.mxu0 %v578
        %v717 = vpop.f32.mrf.mxu0
        %v718 = vadd.f32 0.0, %v717
        %v719 = vpop.f32.mrf.mxu0
        %720 = vmatprep.mubr.f32.mxu0 0.0
        %721 = vmatmul.mubr.f32.gmra.mxu0 %v581
        %v722 = vpop.f32.mrf.mxu0
        %v723 = vadd.f32 0.0, %v722
        %v724 = vpop.f32.mrf.mxu0
        %725 = vmatprep.mubr.f32.mxu0 0.0
        %726 = vmatmul.mubr.f32.gmra.mxu0 %v584
        %v727 = vpop.f32.mrf.mxu0
        %v728 = vadd.f32 0.0, %v727
        %v729 = vpop.f32.mrf.mxu0
        %730 = vdwg.mxu0
        %v731 = vld [vmem:[#allocation2] sm:$0xff]
        %v732 = vld [vmem:[#allocation2 + $0x8] sm:$0xff]
        %v733 = vld [vmem:[#allocation2 + $0x10] sm:$0xff]
        %v734 = vld [vmem:[#allocation2 + $0x18] sm:$0xff]
        %v735 = vld [vmem:[#allocation2 + $0x20] sm:$0xff]
        %v736 = vld [vmem:[#allocation2 + $0x28] sm:$0xff]
        %v737 = vld [vmem:[#allocation2 + $0x30] sm:$0xff]
        %v738 = vld [vmem:[#allocation2 + $0x38] sm:$0xff]
        %v739 = vld [vmem:[#allocation2 + $0x40] sm:$0xff]
        %v740 = vld [vmem:[#allocation2 + $0x48] sm:$0xff]
        %v741 = vld [vmem:[#allocation2 + $0x50] sm:$0xff]
        %v742 = vld [vmem:[#allocation2 + $0x58] sm:$0xff]
        %v743 = vld [vmem:[#allocation2 + $0x60] sm:$0xff]
        %v744 = vld [vmem:[#allocation2 + $0x68] sm:$0xff]
        %v745 = vld [vmem:[#allocation2 + $0x70] sm:$0xff]
        %v746 = vld [vmem:[#allocation2 + $0x78] sm:$0xff]
        %747 = vmax.xlane.f32.xlu0 %v653
        %v748 = vpop.xlane.xlu0 %747
        %749 = vmax.xlane.f32.xlu0 %v658
        %v750 = vpop.xlane.xlu0 %749
        %751 = vmax.xlane.f32.xlu0 %v663
        %v752 = vpop.xlane.xlu0 %751
        %753 = vmax.xlane.f32.xlu0 %v668
        %v754 = vpop.xlane.xlu0 %753
        %755 = vmax.xlane.f32.xlu0 %v673
        %v756 = vpop.xlane.xlu0 %755
        %757 = vmax.xlane.f32.xlu0 %v678
        %v758 = vpop.xlane.xlu0 %757
        %759 = vmax.xlane.f32.xlu0 %v683
        %v760 = vpop.xlane.xlu0 %759
        %761 = vmax.xlane.f32.xlu0 %v688
        %v762 = vpop.xlane.xlu0 %761
        %763 = vmax.xlane.f32.xlu0 %v693
        %v764 = vpop.xlane.xlu0 %763
        %765 = vmax.xlane.f32.xlu0 %v698
        %v766 = vpop.xlane.xlu0 %765
        %767 = vmax.xlane.f32.xlu0 %v703
        %v768 = vpop.xlane.xlu0 %767
        %769 = vmax.xlane.f32.xlu0 %v708
        %v770 = vpop.xlane.xlu0 %769
        %771 = vmax.xlane.f32.xlu0 %v713
        %v772 = vpop.xlane.xlu0 %771
        %773 = vmax.xlane.f32.xlu0 %v718
        %v774 = vpop.xlane.xlu0 %773
        %775 = vmax.xlane.f32.xlu0 %v723
        %v776 = vpop.xlane.xlu0 %775
        %777 = vmax.xlane.f32.xlu0 %v728
        %v778 = vpop.xlane.xlu0 %777
        %v779 = vmax.f32 %v731, %v748
        %v780 = vmax.f32 %v732, %v750
        %v781 = vmax.f32 %v733, %v752
        %v782 = vmax.f32 %v734, %v754
        %v783 = vmax.f32 %v735, %v756
        %v784 = vmax.f32 %v736, %v758
        %v785 = vmax.f32 %v737, %v760
        %v786 = vmax.f32 %v738, %v762
        %v787 = vmax.f32 %v739, %v764
        %v788 = vmax.f32 %v740, %v766
        %v789 = vmax.f32 %v741, %v768
        %v790 = vmax.f32 %v742, %v770
        %v791 = vmax.f32 %v743, %v772
        %v792 = vmax.f32 %v744, %v774
        %v793 = vmax.f32 %v745, %v776
        %v794 = vmax.f32 %v746, %v778
        %v795 = vsub.f32 %v731, %v779
        %v796 = vsub.f32 %v732, %v780
        %v797 = vsub.f32 %v733, %v781
        %v798 = vsub.f32 %v734, %v782
        %v799 = vsub.f32 %v735, %v783
        %v800 = vsub.f32 %v736, %v784
        %v801 = vsub.f32 %v737, %v785
        %v802 = vsub.f32 %v738, %v786
        %v803 = vsub.f32 %v739, %v787
        %v804 = vsub.f32 %v740, %v788
        %v805 = vsub.f32 %v741, %v789
        %v806 = vsub.f32 %v742, %v790
        %v807 = vsub.f32 %v743, %v791
        %v808 = vsub.f32 %v744, %v792
        %v809 = vsub.f32 %v745, %v793
        %v810 = vsub.f32 %v746, %v794
        %v811 = vmul.f32 %v795, 1.442695
        %v812 = vpow.pop %v811
        %v813 = vmul.f32 %v796, 1.442695
        %v814 = vpow.pop %v813
        %v815 = vmul.f32 %v797, 1.442695
        %v816 = vpow.pop %v815
        %v817 = vmul.f32 %v798, 1.442695
        %v818 = vpow.pop %v817
        %v819 = vmul.f32 %v799, 1.442695
        %v820 = vpow.pop %v819
        %v821 = vmul.f32 %v800, 1.442695
        %v822 = vpow.pop %v821
        %v823 = vmul.f32 %v801, 1.442695
        %v824 = vpow.pop %v823
        %v825 = vmul.f32 %v802, 1.442695
        %v826 = vpow.pop %v825
        %v827 = vmul.f32 %v803, 1.442695
        %v828 = vpow.pop %v827
        %v829 = vmul.f32 %v804, 1.442695
        %v830 = vpow.pop %v829
        %v831 = vmul.f32 %v805, 1.442695
        %v832 = vpow.pop %v831
        %v833 = vmul.f32 %v806, 1.442695
        %v834 = vpow.pop %v833
        %v835 = vmul.f32 %v807, 1.442695
        %v836 = vpow.pop %v835
        %v837 = vmul.f32 %v808, 1.442695
        %v838 = vpow.pop %v837
        %v839 = vmul.f32 %v809, 1.442695
        %v840 = vpow.pop %v839
        %v841 = vmul.f32 %v810, 1.442695
        %v842 = vpow.pop %v841
        %844 = vset.pattern.permute.xlu0 0
        %845 = vperm.xlu0 %844, %v779
        %v846 = vpop.permute.xlu0 %845
        %849 = vset.pattern.permute.xlu0 0
        %850 = vperm.xlu0 %849, %v780
        %v851 = vpop.permute.xlu0 %850
        %854 = vset.pattern.permute.xlu0 0
        %855 = vperm.xlu0 %854, %v781
        %v856 = vpop.permute.xlu0 %855
        %859 = vset.pattern.permute.xlu0 0
        %860 = vperm.xlu0 %859, %v782
        %v861 = vpop.permute.xlu0 %860
        %864 = vset.pattern.permute.xlu0 0
        %865 = vperm.xlu0 %864, %v783
        %v866 = vpop.permute.xlu0 %865
        %869 = vset.pattern.permute.xlu0 0
        %870 = vperm.xlu0 %869, %v784
        %v871 = vpop.permute.xlu0 %870
        %874 = vset.pattern.permute.xlu0 0
        %875 = vperm.xlu0 %874, %v785
        %v876 = vpop.permute.xlu0 %875
        %879 = vset.pattern.permute.xlu0 0
        %880 = vperm.xlu0 %879, %v786
        %v881 = vpop.permute.xlu0 %880
        %884 = vset.pattern.permute.xlu0 0
        %885 = vperm.xlu0 %884, %v787
        %v886 = vpop.permute.xlu0 %885
        %889 = vset.pattern.permute.xlu0 0
        %890 = vperm.xlu0 %889, %v788
        %v891 = vpop.permute.xlu0 %890
        %894 = vset.pattern.permute.xlu0 0
        %895 = vperm.xlu0 %894, %v789
        %v896 = vpop.permute.xlu0 %895
        %899 = vset.pattern.permute.xlu0 0
        %900 = vperm.xlu0 %899, %v790
        %v901 = vpop.permute.xlu0 %900
        %904 = vset.pattern.permute.xlu0 0
        %905 = vperm.xlu0 %904, %v791
        %v906 = vpop.permute.xlu0 %905
        %909 = vset.pattern.permute.xlu0 0
        %910 = vperm.xlu0 %909, %v792
        %v911 = vpop.permute.xlu0 %910
        %914 = vset.pattern.permute.xlu0 0
        %915 = vperm.xlu0 %914, %v793
        %v916 = vpop.permute.xlu0 %915
        %919 = vset.pattern.permute.xlu0 0
        %920 = vperm.xlu0 %919, %v794
        %v921 = vpop.permute.xlu0 %920
        %v923 = vsub.f32 %v653, %v846
        %v924 = vsub.f32 %v658, %v851
        %v925 = vsub.f32 %v663, %v856
        %v926 = vsub.f32 %v668, %v861
        %v927 = vsub.f32 %v673, %v866
        %v928 = vsub.f32 %v678, %v871
        %v929 = vsub.f32 %v683, %v876
        %v930 = vsub.f32 %v688, %v881
        %v931 = vsub.f32 %v693, %v886
        %v932 = vsub.f32 %v698, %v891
        %v933 = vsub.f32 %v703, %v896
        %v934 = vsub.f32 %v708, %v901
        %v935 = vsub.f32 %v713, %v906
        %v936 = vsub.f32 %v718, %v911
        %v937 = vsub.f32 %v723, %v916
        %v938 = vsub.f32 %v728, %v921
        %v939 = vmul.f32 %v923, 1.442695
        %v940 = vpow.pop %v939
        %v941 = vmul.f32 %v924, 1.442695
        %v942 = vpow.pop %v941
        %v943 = vmul.f32 %v925, 1.442695
        %v944 = vpow.pop %v943
        %v945 = vmul.f32 %v926, 1.442695
        %v946 = vpow.pop %v945
        %v947 = vmul.f32 %v927, 1.442695
        %v948 = vpow.pop %v947
        %v949 = vmul.f32 %v928, 1.442695
        %v950 = vpow.pop %v949
        %v951 = vmul.f32 %v929, 1.442695
        %v952 = vpow.pop %v951
        %v953 = vmul.f32 %v930, 1.442695
        %v954 = vpow.pop %v953
        %v955 = vmul.f32 %v931, 1.442695
        %v956 = vpow.pop %v955
        %v957 = vmul.f32 %v932, 1.442695
        %v958 = vpow.pop %v957
        %v959 = vmul.f32 %v933, 1.442695
        %v960 = vpow.pop %v959
        %v961 = vmul.f32 %v934, 1.442695
        %v962 = vpow.pop %v961
        %v963 = vmul.f32 %v935, 1.442695
        %v964 = vpow.pop %v963
        %v965 = vmul.f32 %v936, 1.442695
        %v966 = vpow.pop %v965
        %v967 = vmul.f32 %v937, 1.442695
        %v968 = vpow.pop %v967
        %v969 = vmul.f32 %v938, 1.442695
        %v970 = vpow.pop %v969
        %v971 = vld [vmem:[#allocation3] sm:$0xff]
        %v972 = vld [vmem:[#allocation3 + $0x8] sm:$0xff]
        %v973 = vld [vmem:[#allocation3 + $0x10] sm:$0xff]
        %v974 = vld [vmem:[#allocation3 + $0x18] sm:$0xff]
        %v975 = vld [vmem:[#allocation3 + $0x20] sm:$0xff]
        %v976 = vld [vmem:[#allocation3 + $0x28] sm:$0xff]
        %v977 = vld [vmem:[#allocation3 + $0x30] sm:$0xff]
        %v978 = vld [vmem:[#allocation3 + $0x38] sm:$0xff]
        %v979 = vld [vmem:[#allocation3 + $0x40] sm:$0xff]
        %v980 = vld [vmem:[#allocation3 + $0x48] sm:$0xff]
        %v981 = vld [vmem:[#allocation3 + $0x50] sm:$0xff]
        %v982 = vld [vmem:[#allocation3 + $0x58] sm:$0xff]
        %v983 = vld [vmem:[#allocation3 + $0x60] sm:$0xff]
        %v984 = vld [vmem:[#allocation3 + $0x68] sm:$0xff]
        %v985 = vld [vmem:[#allocation3 + $0x70] sm:$0xff]
        %v986 = vld [vmem:[#allocation3 + $0x78] sm:$0xff]
        %v987 = vmul.f32 %v812, %v971
        %v988 = vmul.f32 %v814, %v972
        %v989 = vmul.f32 %v816, %v973
        %v990 = vmul.f32 %v818, %v974
        %v991 = vmul.f32 %v820, %v975
        %v992 = vmul.f32 %v822, %v976
        %v993 = vmul.f32 %v824, %v977
        %v994 = vmul.f32 %v826, %v978
        %v995 = vmul.f32 %v828, %v979
        %v996 = vmul.f32 %v830, %v980
        %v997 = vmul.f32 %v832, %v981
        %v998 = vmul.f32 %v834, %v982
        %v999 = vmul.f32 %v836, %v983
        %v1000 = vmul.f32 %v838, %v984
        %v1001 = vmul.f32 %v840, %v985
        %v1002 = vmul.f32 %v842, %v986
        %1003 = vadd.xlane.f32.xlu0 %v940
        %v1004 = vpop.xlane.xlu0 %1003
        %1005 = vadd.xlane.f32.xlu0 %v942
        %v1006 = vpop.xlane.xlu0 %1005
        %1007 = vadd.xlane.f32.xlu0 %v944
        %v1008 = vpop.xlane.xlu0 %1007
        %1009 = vadd.xlane.f32.xlu0 %v946
        %v1010 = vpop.xlane.xlu0 %1009
        %1011 = vadd.xlane.f32.xlu0 %v948
        %v1012 = vpop.xlane.xlu0 %1011
        %1013 = vadd.xlane.f32.xlu0 %v950
        %v1014 = vpop.xlane.xlu0 %1013
        %1015 = vadd.xlane.f32.xlu0 %v952
        %v1016 = vpop.xlane.xlu0 %1015
        %1017 = vadd.xlane.f32.xlu0 %v954
        %v1018 = vpop.xlane.xlu0 %1017
        %1019 = vadd.xlane.f32.xlu0 %v956
        %v1020 = vpop.xlane.xlu0 %1019
        %1021 = vadd.xlane.f32.xlu0 %v958
        %v1022 = vpop.xlane.xlu0 %1021
        %1023 = vadd.xlane.f32.xlu0 %v960
        %v1024 = vpop.xlane.xlu0 %1023
        %1025 = vadd.xlane.f32.xlu0 %v962
        %v1026 = vpop.xlane.xlu0 %1025
        %1027 = vadd.xlane.f32.xlu0 %v964
        %v1028 = vpop.xlane.xlu0 %1027
        %1029 = vadd.xlane.f32.xlu0 %v966
        %v1030 = vpop.xlane.xlu0 %1029
        %1031 = vadd.xlane.f32.xlu0 %v968
        %v1032 = vpop.xlane.xlu0 %1031
        %1033 = vadd.xlane.f32.xlu0 %v970
        %v1034 = vpop.xlane.xlu0 %1033
        %v1035 = vadd.f32 %v987, %v1004
        %v1036 = vadd.f32 %v988, %v1006
        %v1037 = vadd.f32 %v989, %v1008
        %v1038 = vadd.f32 %v990, %v1010
        %v1039 = vadd.f32 %v991, %v1012
        %v1040 = vadd.f32 %v992, %v1014
        %v1041 = vadd.f32 %v993, %v1016
        %v1042 = vadd.f32 %v994, %v1018
        %v1043 = vadd.f32 %v995, %v1020
        %v1044 = vadd.f32 %v996, %v1022
        %v1045 = vadd.f32 %v997, %v1024
        %v1046 = vadd.f32 %v998, %v1026
        %v1047 = vadd.f32 %v999, %v1028
        %v1048 = vadd.f32 %v1000, %v1030
        %v1049 = vadd.f32 %v1001, %v1032
        %v1050 = vadd.f32 %v1002, %v1034
        %vm1051 = vcmask 7168
        %1052 = vst.msk [vmem:[#allocation3] sm:$0xff] %vm1051, %v1035
        %1053 = vst.msk [vmem:[#allocation3 + $0x8] sm:$0xff] %vm1051, %v1036
        %1054 = vst.msk [vmem:[#allocation3 + $0x10] sm:$0xff] %vm1051, %v1037
        %1055 = vst.msk [vmem:[#allocation3 + $0x18] sm:$0xff] %vm1051, %v1038
        %1056 = vst.msk [vmem:[#allocation3 + $0x20] sm:$0xff] %vm1051, %v1039
        %1057 = vst.msk [vmem:[#allocation3 + $0x28] sm:$0xff] %vm1051, %v1040
        %1058 = vst.msk [vmem:[#allocation3 + $0x30] sm:$0xff] %vm1051, %v1041
        %1059 = vst.msk [vmem:[#allocation3 + $0x38] sm:$0xff] %vm1051, %v1042
        %1060 = vst.msk [vmem:[#allocation3 + $0x40] sm:$0xff] %vm1051, %v1043
        %1061 = vst.msk [vmem:[#allocation3 + $0x48] sm:$0xff] %vm1051, %v1044
        %1062 = vst.msk [vmem:[#allocation3 + $0x50] sm:$0xff] %vm1051, %v1045
        %1063 = vst.msk [vmem:[#allocation3 + $0x58] sm:$0xff] %vm1051, %v1046
        %1064 = vst.msk [vmem:[#allocation3 + $0x60] sm:$0xff] %vm1051, %v1047
        %1065 = vst.msk [vmem:[#allocation3 + $0x68] sm:$0xff] %vm1051, %v1048
        %1066 = vst.msk [vmem:[#allocation3 + $0x70] sm:$0xff] %vm1051, %v1049
        %1067 = vst.msk [vmem:[#allocation3 + $0x78] sm:$0xff] %vm1051, %v1050
        %v1068 = vld [vmem:[#allocation4] sm:$0xff]
        %v1069 = vld [vmem:[#allocation4 + $0x8] sm:$0xff]
        %v1070 = vld [vmem:[#allocation4 + $0x10] sm:$0xff]
        %v1071 = vld [vmem:[#allocation4 + $0x18] sm:$0xff]
        %v1072 = vld [vmem:[#allocation4 + $0x20] sm:$0xff]
        %v1073 = vld [vmem:[#allocation4 + $0x28] sm:$0xff]
        %v1074 = vld [vmem:[#allocation4 + $0x30] sm:$0xff]
        %v1075 = vld [vmem:[#allocation4 + $0x38] sm:$0xff]
        %v1076 = vld [vmem:[#allocation4 + $0x40] sm:$0xff]
        %v1077 = vld [vmem:[#allocation4 + $0x48] sm:$0xff]
        %v1078 = vld [vmem:[#allocation4 + $0x50] sm:$0xff]
        %v1079 = vld [vmem:[#allocation4 + $0x58] sm:$0xff]
        %v1080 = vld [vmem:[#allocation4 + $0x60] sm:$0xff]
        %v1081 = vld [vmem:[#allocation4 + $0x68] sm:$0xff]
        %v1082 = vld [vmem:[#allocation4 + $0x70] sm:$0xff]
        %v1083 = vld [vmem:[#allocation4 + $0x78] sm:$0xff]
        %1085 = vset.pattern.permute.xlu0 0
        %1086 = vperm.xlu0 %1085, %v812
        %v1087 = vpop.permute.xlu0 %1086
        %1090 = vset.pattern.permute.xlu0 0
        %1091 = vperm.xlu0 %1090, %v814
        %v1092 = vpop.permute.xlu0 %1091
        %1095 = vset.pattern.permute.xlu0 0
        %1096 = vperm.xlu0 %1095, %v816
        %v1097 = vpop.permute.xlu0 %1096
        %1100 = vset.pattern.permute.xlu0 0
        %1101 = vperm.xlu0 %1100, %v818
        %v1102 = vpop.permute.xlu0 %1101
        %1105 = vset.pattern.permute.xlu0 0
        %1106 = vperm.xlu0 %1105, %v820
        %v1107 = vpop.permute.xlu0 %1106
        %1110 = vset.pattern.permute.xlu0 0
        %1111 = vperm.xlu0 %1110, %v822
        %v1112 = vpop.permute.xlu0 %1111
        %1115 = vset.pattern.permute.xlu0 0
        %1116 = vperm.xlu0 %1115, %v824
        %v1117 = vpop.permute.xlu0 %1116
        %1120 = vset.pattern.permute.xlu0 0
        %1121 = vperm.xlu0 %1120, %v826
        %v1122 = vpop.permute.xlu0 %1121
        %1125 = vset.pattern.permute.xlu0 0
        %1126 = vperm.xlu0 %1125, %v828
        %v1127 = vpop.permute.xlu0 %1126
        %1130 = vset.pattern.permute.xlu0 0
        %1131 = vperm.xlu0 %1130, %v830
        %v1132 = vpop.permute.xlu0 %1131
        %1135 = vset.pattern.permute.xlu0 0
        %1136 = vperm.xlu0 %1135, %v832
        %v1137 = vpop.permute.xlu0 %1136
        %1140 = vset.pattern.permute.xlu0 0
        %1141 = vperm.xlu0 %1140, %v834
        %v1142 = vpop.permute.xlu0 %1141
        %1145 = vset.pattern.permute.xlu0 0
        %1146 = vperm.xlu0 %1145, %v836
        %v1147 = vpop.permute.xlu0 %1146
        %1150 = vset.pattern.permute.xlu0 0
        %1151 = vperm.xlu0 %1150, %v838
        %v1152 = vpop.permute.xlu0 %1151
        %1155 = vset.pattern.permute.xlu0 0
        %1156 = vperm.xlu0 %1155, %v840
        %v1157 = vpop.permute.xlu0 %1156
        %1160 = vset.pattern.permute.xlu0 0
        %1161 = vperm.xlu0 %1160, %v842
        %v1162 = vpop.permute.xlu0 %1161
        %v1164 = vmul.f32 %v1087, %v1068
        %v1165 = vmul.f32 %v1092, %v1069
        %v1166 = vmul.f32 %v1097, %v1070
        %v1167 = vmul.f32 %v1102, %v1071
        %v1168 = vmul.f32 %v1107, %v1072
        %v1169 = vmul.f32 %v1112, %v1073
        %v1170 = vmul.f32 %v1117, %v1074
        %v1171 = vmul.f32 %v1122, %v1075
        %v1172 = vmul.f32 %v1127, %v1076
        %v1173 = vmul.f32 %v1132, %v1077
        %v1174 = vmul.f32 %v1137, %v1078
        %v1175 = vmul.f32 %v1142, %v1079
        %v1176 = vmul.f32 %v1147, %v1080
        %v1177 = vmul.f32 %v1152, %v1081
        %v1178 = vmul.f32 %v1157, %v1082
        %v1179 = vmul.f32 %v1162, %v1083
        %v1180 = vld [vmem:[%s395] sm:$0xff]
        %v1181 = vld [vmem:[%s395 + $0x8] sm:$0xff]
        %v1182 = vld [vmem:[%s395 + $0x10] sm:$0xff]
        %v1183 = vld [vmem:[%s395 + $0x18] sm:$0xff]
        %v1184 = vld [vmem:[%s395 + $0x20] sm:$0xff]
        %v1185 = vld [vmem:[%s395 + $0x28] sm:$0xff]
        %v1186 = vld [vmem:[%s395 + $0x30] sm:$0xff]
        %v1187 = vld [vmem:[%s395 + $0x38] sm:$0xff]
        %1188 = vmatprep.subr.mxu0 0.0
        %1189 = vmatpush1.xpose.msra.mxu0 0.0
        %1190 = vmatprep.subr.mxu0 0.0
        %1191 = vmatpush1.xpose.msra.mxu0 0.0
        %1192 = vmatprep.subr.mxu0 0.0
        %1193 = vmatpush1.xpose.msra.mxu0 0.0
        %1194 = vmatprep.subr.mxu0 0.0
        %1195 = vmatpush1.xpose.msra.mxu0 0.0
        %1196 = vmatprep.subr.mxu0 0.0
        %1197 = vmatpush1.xpose.msra.mxu0 0.0
        %1198 = vmatprep.subr.mxu0 0.0
        %1199 = vmatpush1.xpose.msra.mxu0 0.0
        %1200 = vmatprep.subr.mxu0 0.0
        %1201 = vmatpush1.xpose.msra.mxu0 0.0
        %1202 = vmatprep.subr.mxu0 0.0
        %1203 = vmatpush1.xpose.msra.mxu0 0.0
        %1204 = vmatprep.subr.mxu0 0.0
        %1205 = vmatpush1.xpose.msra.mxu0 %v1187
        %1206 = vmatprep.subr.mxu0 0.0
        %1207 = vmatpush1.xpose.msra.mxu0 %v1186
        %1208 = vmatprep.subr.mxu0 0.0
        %1209 = vmatpush1.xpose.msra.mxu0 %v1185
        %1210 = vmatprep.subr.mxu0 0.0
        %1211 = vmatpush1.xpose.msra.mxu0 %v1184
        %1212 = vmatprep.subr.mxu0 0.0
        %1213 = vmatpush1.xpose.msra.mxu0 %v1183
        %1214 = vmatprep.subr.mxu0 0.0
        %1215 = vmatpush1.xpose.msra.mxu0 %v1182
        %1216 = vmatprep.subr.mxu0 0.0
        %1217 = vmatpush1.xpose.msra.mxu0 %v1181
        %1218 = vmatprep.subr.mxu0 0.0
        %1219 = vmatpush1.xpose.msra.mxu0 %v1180
        %1220 = vmatprep.subr.mxu0 0.0
        %1221 = vmatpush2.xpose.msra.mxu0 0.0
        %1222 = vmatprep.subr.mxu0 0.0
        %1223 = vmatpush2.xpose.msra.mxu0 0.0
        %1224 = vmatprep.subr.mxu0 0.0
        %1225 = vmatpush2.xpose.msra.mxu0 0.0
        %1226 = vmatprep.subr.mxu0 0.0
        %1227 = vmatpush2.xpose.msra.mxu0 0.0
        %1228 = vmatprep.subr.mxu0 0.0
        %1229 = vmatpush2.xpose.msra.mxu0 0.0
        %1230 = vmatprep.subr.mxu0 0.0
        %1231 = vmatpush2.xpose.msra.mxu0 0.0
        %1232 = vmatprep.subr.mxu0 0.0
        %1233 = vmatpush2.xpose.msra.mxu0 0.0
        %1234 = vmatprep.subr.mxu0 0.0
        %1235 = vmatpush2.xpose.msra.mxu0 0.0
        %1236 = vmatprep.subr.mxu0 0.0
        %1237 = vmatpush2.xpose.msra.mxu0 0.0
        %1238 = vmatprep.subr.mxu0 0.0
        %1239 = vmatpush2.xpose.msra.mxu0 0.0
        %1240 = vmatprep.subr.mxu0 0.0
        %1241 = vmatpush2.xpose.msra.mxu0 0.0
        %1242 = vmatprep.subr.mxu0 0.0
        %1243 = vmatpush2.xpose.msra.mxu0 0.0
        %1244 = vmatprep.subr.mxu0 0.0
        %1245 = vmatpush2.xpose.msra.mxu0 0.0
        %1246 = vmatprep.subr.mxu0 0.0
        %1247 = vmatpush2.xpose.msra.mxu0 0.0
        %1248 = vmatprep.subr.mxu0 0.0
        %1249 = vmatpush2.xpose.msra.mxu0 0.0
        %1250 = vmatprep.subr.mxu0 0.0
        %1251 = vmatpush2.xpose.msra.mxu0 0.0
        %1252 = vmatprep.mubr.f32.mxu0 0.0
        %1253 = vmatmul.mubr.f32.gmra.mxu0 %v940
        %v1254 = vpop.f32.mrf.mxu0
        %v1255 = vadd.f32 0.0, %v1254
        %v1256 = vpop.f32.mrf.mxu0
        %1257 = vmatprep.mubr.f32.mxu0 0.0
        %1258 = vmatmul.mubr.f32.gmra.mxu0 %v942
        %v1259 = vpop.f32.mrf.mxu0
        %v1260 = vadd.f32 0.0, %v1259
        %v1261 = vpop.f32.mrf.mxu0
        %1262 = vmatprep.mubr.f32.mxu0 0.0
        %1263 = vmatmul.mubr.f32.gmra.mxu0 %v944
        %v1264 = vpop.f32.mrf.mxu0
        %v1265 = vadd.f32 0.0, %v1264
        %v1266 = vpop.f32.mrf.mxu0
        %1267 = vmatprep.mubr.f32.mxu0 0.0
        %1268 = vmatmul.mubr.f32.gmra.mxu0 %v946
        %v1269 = vpop.f32.mrf.mxu0
        %v1270 = vadd.f32 0.0, %v1269
        %v1271 = vpop.f32.mrf.mxu0
        %1272 = vmatprep.mubr.f32.mxu0 0.0
        %1273 = vmatmul.mubr.f32.gmra.mxu0 %v948
        %v1274 = vpop.f32.mrf.mxu0
        %v1275 = vadd.f32 0.0, %v1274
        %v1276 = vpop.f32.mrf.mxu0
        %1277 = vmatprep.mubr.f32.mxu0 0.0
        %1278 = vmatmul.mubr.f32.gmra.mxu0 %v950
        %v1279 = vpop.f32.mrf.mxu0
        %v1280 = vadd.f32 0.0, %v1279
        %v1281 = vpop.f32.mrf.mxu0
        %1282 = vmatprep.mubr.f32.mxu0 0.0
        %1283 = vmatmul.mubr.f32.gmra.mxu0 %v952
        %v1284 = vpop.f32.mrf.mxu0
        %v1285 = vadd.f32 0.0, %v1284
        %v1286 = vpop.f32.mrf.mxu0
        %1287 = vmatprep.mubr.f32.mxu0 0.0
        %1288 = vmatmul.mubr.f32.gmra.mxu0 %v954
        %v1289 = vpop.f32.mrf.mxu0
        %v1290 = vadd.f32 0.0, %v1289
        %v1291 = vpop.f32.mrf.mxu0
        %1292 = vmatprep.mubr.f32.mxu0 0.0
        %1293 = vmatmul.mubr.f32.gmra.mxu0 %v956
        %v1294 = vpop.f32.mrf.mxu0
        %v1295 = vadd.f32 0.0, %v1294
        %v1296 = vpop.f32.mrf.mxu0
        %1297 = vmatprep.mubr.f32.mxu0 0.0
        %1298 = vmatmul.mubr.f32.gmra.mxu0 %v958
        %v1299 = vpop.f32.mrf.mxu0
        %v1300 = vadd.f32 0.0, %v1299
        %v1301 = vpop.f32.mrf.mxu0
        %1302 = vmatprep.mubr.f32.mxu0 0.0
        %1303 = vmatmul.mubr.f32.gmra.mxu0 %v960
        %v1304 = vpop.f32.mrf.mxu0
        %v1305 = vadd.f32 0.0, %v1304
        %v1306 = vpop.f32.mrf.mxu0
        %1307 = vmatprep.mubr.f32.mxu0 0.0
        %1308 = vmatmul.mubr.f32.gmra.mxu0 %v962
        %v1309 = vpop.f32.mrf.mxu0
        %v1310 = vadd.f32 0.0, %v1309
        %v1311 = vpop.f32.mrf.mxu0
        %1312 = vmatprep.mubr.f32.mxu0 0.0
        %1313 = vmatmul.mubr.f32.gmra.mxu0 %v964
        %v1314 = vpop.f32.mrf.mxu0
        %v1315 = vadd.f32 0.0, %v1314
        %v1316 = vpop.f32.mrf.mxu0
        %1317 = vmatprep.mubr.f32.mxu0 0.0
        %1318 = vmatmul.mubr.f32.gmra.mxu0 %v966
        %v1319 = vpop.f32.mrf.mxu0
        %v1320 = vadd.f32 0.0, %v1319
        %v1321 = vpop.f32.mrf.mxu0
        %1322 = vmatprep.mubr.f32.mxu0 0.0
        %1323 = vmatmul.mubr.f32.gmra.mxu0 %v968
        %v1324 = vpop.f32.mrf.mxu0
        %v1325 = vadd.f32 0.0, %v1324
        %v1326 = vpop.f32.mrf.mxu0
        %1327 = vmatprep.mubr.f32.mxu0 0.0
        %1328 = vmatmul.mubr.f32.gmra.mxu0 %v970
        %v1329 = vpop.f32.mrf.mxu0
        %v1330 = vadd.f32 0.0, %v1329
        %v1331 = vpop.f32.mrf.mxu0
        %1332 = vdwg.mxu0
        %v1333 = vadd.f32 %v1164, %v1255
        %v1334 = vadd.f32 %v1165, %v1260
        %v1335 = vadd.f32 %v1166, %v1265
        %v1336 = vadd.f32 %v1167, %v1270
        %v1337 = vadd.f32 %v1168, %v1275
        %v1338 = vadd.f32 %v1169, %v1280
        %v1339 = vadd.f32 %v1170, %v1285
        %v1340 = vadd.f32 %v1171, %v1290
        %v1341 = vadd.f32 %v1172, %v1295
        %v1342 = vadd.f32 %v1173, %v1300
        %v1343 = vadd.f32 %v1174, %v1305
        %v1344 = vadd.f32 %v1175, %v1310
        %v1345 = vadd.f32 %v1176, %v1315
        %v1346 = vadd.f32 %v1177, %v1320
        %v1347 = vadd.f32 %v1178, %v1325
        %v1348 = vadd.f32 %v1179, %v1330
        %vm1349 = vcmask 523264
        %1350 = vst.msk [vmem:[#allocation4] sm:$0xff] %vm1349, %v1333
        %1351 = vst.msk [vmem:[#allocation4 + $0x8] sm:$0xff] %vm1349, %v1334
        %1352 = vst.msk [vmem:[#allocation4 + $0x10] sm:$0xff] %vm1349, %v1335
        %1353 = vst.msk [vmem:[#allocation4 + $0x18] sm:$0xff] %vm1349, %v1336
        %1354 = vst.msk [vmem:[#allocation4 + $0x20] sm:$0xff] %vm1349, %v1337
        %1355 = vst.msk [vmem:[#allocation4 + $0x28] sm:$0xff] %vm1349, %v1338
        %1356 = vst.msk [vmem:[#allocation4 + $0x30] sm:$0xff] %vm1349, %v1339
        %1357 = vst.msk [vmem:[#allocation4 + $0x38] sm:$0xff] %vm1349, %v1340
        %1358 = vst.msk [vmem:[#allocation4 + $0x40] sm:$0xff] %vm1349, %v1341
        %1359 = vst.msk [vmem:[#allocation4 + $0x48] sm:$0xff] %vm1349, %v1342
        %1360 = vst.msk [vmem:[#allocation4 + $0x50] sm:$0xff] %vm1349, %v1343
        %1361 = vst.msk [vmem:[#allocation4 + $0x58] sm:$0xff] %vm1349, %v1344
        %1362 = vst.msk [vmem:[#allocation4 + $0x60] sm:$0xff] %vm1349, %v1345
        %1363 = vst.msk [vmem:[#allocation4 + $0x68] sm:$0xff] %vm1349, %v1346
        %1364 = vst.msk [vmem:[#allocation4 + $0x70] sm:$0xff] %vm1349, %v1347
        %1365 = vst.msk [vmem:[#allocation4 + $0x78] sm:$0xff] %vm1349, %v1348
        %1366 = vst.msk [vmem:[#allocation2] sm:$0xff] %vm1051, %v779
        %1367 = vst.msk [vmem:[#allocation2 + $0x8] sm:$0xff] %vm1051, %v780
        %1368 = vst.msk [vmem:[#allocation2 + $0x10] sm:$0xff] %vm1051, %v781
        %1369 = vst.msk [vmem:[#allocation2 + $0x18] sm:$0xff] %vm1051, %v782
        %1370 = vst.msk [vmem:[#allocation2 + $0x20] sm:$0xff] %vm1051, %v783
        %1371 = vst.msk [vmem:[#allocation2 + $0x28] sm:$0xff] %vm1051, %v784
        %1372 = vst.msk [vmem:[#allocation2 + $0x30] sm:$0xff] %vm1051, %v785
        %1373 = vst.msk [vmem:[#allocation2 + $0x38] sm:$0xff] %vm1051, %v786
        %1374 = vst.msk [vmem:[#allocation2 + $0x40] sm:$0xff] %vm1051, %v787
        %1375 = vst.msk [vmem:[#allocation2 + $0x48] sm:$0xff] %vm1051, %v788
        %1376 = vst.msk [vmem:[#allocation2 + $0x50] sm:$0xff] %vm1051, %v789
        %1377 = vst.msk [vmem:[#allocation2 + $0x58] sm:$0xff] %vm1051, %v790
        %1378 = vst.msk [vmem:[#allocation2 + $0x60] sm:$0xff] %vm1051, %v791
        %1379 = vst.msk [vmem:[#allocation2 + $0x68] sm:$0xff] %vm1051, %v792
        %1380 = vst.msk [vmem:[#allocation2 + $0x70] sm:$0xff] %vm1051, %v793
        %1381 = vst.msk [vmem:[#allocation2 + $0x78] sm:$0xff] %vm1051, %v794
        %p1382 = scmp.eq.s32.totalorder %s27, 1
        // Predicated region
        $region121: #{tpu_custom_call.1} parent=107 // pred_check
          %p1383 = pneg %p1382
        $region122: #{tpu_custom_call.1} parent=107 // pred_check_branch
          %1385 = sbr.rel (%p1383) target = $region124
        $region123: #{tpu_custom_call.1} parent=107 // pred_region
          %v1386 = vld [vmem:[#allocation4] sm:$0xff]
          %v1387 = vld [vmem:[#allocation4 + $0x8] sm:$0xff]
          %v1388 = vld [vmem:[#allocation4 + $0x10] sm:$0xff]
          %v1389 = vld [vmem:[#allocation4 + $0x18] sm:$0xff]
          %v1390 = vld [vmem:[#allocation4 + $0x20] sm:$0xff]
          %v1391 = vld [vmem:[#allocation4 + $0x28] sm:$0xff]
          %v1392 = vld [vmem:[#allocation4 + $0x30] sm:$0xff]
          %v1393 = vld [vmem:[#allocation4 + $0x38] sm:$0xff]
          %v1394 = vld [vmem:[#allocation4 + $0x40] sm:$0xff]
          %v1395 = vld [vmem:[#allocation4 + $0x48] sm:$0xff]
          %v1396 = vld [vmem:[#allocation4 + $0x50] sm:$0xff]
          %v1397 = vld [vmem:[#allocation4 + $0x58] sm:$0xff]
          %v1398 = vld [vmem:[#allocation4 + $0x60] sm:$0xff]
          %v1399 = vld [vmem:[#allocation4 + $0x68] sm:$0xff]
          %v1400 = vld [vmem:[#allocation4 + $0x70] sm:$0xff]
          %v1401 = vld [vmem:[#allocation4 + $0x78] sm:$0xff]
          %v1402 = vld [vmem:[#allocation3] sm:$0xff]
          %v1403 = vld [vmem:[#allocation3 + $0x8] sm:$0xff]
          %v1404 = vld [vmem:[#allocation3 + $0x10] sm:$0xff]
          %v1405 = vld [vmem:[#allocation3 + $0x18] sm:$0xff]
          %v1406 = vld [vmem:[#allocation3 + $0x20] sm:$0xff]
          %v1407 = vld [vmem:[#allocation3 + $0x28] sm:$0xff]
          %v1408 = vld [vmem:[#allocation3 + $0x30] sm:$0xff]
          %v1409 = vld [vmem:[#allocation3 + $0x38] sm:$0xff]
          %v1410 = vld [vmem:[#allocation3 + $0x40] sm:$0xff]
          %v1411 = vld [vmem:[#allocation3 + $0x48] sm:$0xff]
          %v1412 = vld [vmem:[#allocation3 + $0x50] sm:$0xff]
          %v1413 = vld [vmem:[#allocation3 + $0x58] sm:$0xff]
          %v1414 = vld [vmem:[#allocation3 + $0x60] sm:$0xff]
          %v1415 = vld [vmem:[#allocation3 + $0x68] sm:$0xff]
          %v1416 = vld [vmem:[#allocation3 + $0x70] sm:$0xff]
          %v1417 = vld [vmem:[#allocation3 + $0x78] sm:$0xff]
          %1419 = vset.pattern.permute.xlu0 0
          %1420 = vperm.xlu0 %1419, %v1402
          %v1421 = vpop.permute.xlu0 %1420
          %1424 = vset.pattern.permute.xlu0 0
          %1425 = vperm.xlu0 %1424, %v1403
          %v1426 = vpop.permute.xlu0 %1425
          %1429 = vset.pattern.permute.xlu0 0
          %1430 = vperm.xlu0 %1429, %v1404
          %v1431 = vpop.permute.xlu0 %1430
          %1434 = vset.pattern.permute.xlu0 0
          %1435 = vperm.xlu0 %1434, %v1405
          %v1436 = vpop.permute.xlu0 %1435
          %1439 = vset.pattern.permute.xlu0 0
          %1440 = vperm.xlu0 %1439, %v1406
          %v1441 = vpop.permute.xlu0 %1440
          %1444 = vset.pattern.permute.xlu0 0
          %1445 = vperm.xlu0 %1444, %v1407
          %v1446 = vpop.permute.xlu0 %1445
          %1449 = vset.pattern.permute.xlu0 0
          %1450 = vperm.xlu0 %1449, %v1408
          %v1451 = vpop.permute.xlu0 %1450
          %1454 = vset.pattern.permute.xlu0 0
          %1455 = vperm.xlu0 %1454, %v1409
          %v1456 = vpop.permute.xlu0 %1455
          %1459 = vset.pattern.permute.xlu0 0
          %1460 = vperm.xlu0 %1459, %v1410
          %v1461 = vpop.permute.xlu0 %1460
          %1464 = vset.pattern.permute.xlu0 0
          %1465 = vperm.xlu0 %1464, %v1411
          %v1466 = vpop.permute.xlu0 %1465
          %1469 = vset.pattern.permute.xlu0 0
          %1470 = vperm.xlu0 %1469, %v1412
          %v1471 = vpop.permute.xlu0 %1470
          %1474 = vset.pattern.permute.xlu0 0
          %1475 = vperm.xlu0 %1474, %v1413
          %v1476 = vpop.permute.xlu0 %1475
          %1479 = vset.pattern.permute.xlu0 0
          %1480 = vperm.xlu0 %1479, %v1414
          %v1481 = vpop.permute.xlu0 %1480
          %1484 = vset.pattern.permute.xlu0 0
          %1485 = vperm.xlu0 %1484, %v1415
          %v1486 = vpop.permute.xlu0 %1485
          %1489 = vset.pattern.permute.xlu0 0
          %1490 = vperm.xlu0 %1489, %v1416
          %v1491 = vpop.permute.xlu0 %1490
          %1494 = vset.pattern.permute.xlu0 0
          %1495 = vperm.xlu0 %1494, %v1417
          %v1496 = vpop.permute.xlu0 %1495
          %v1498 = vrcp.pop %v1421
          %v1499 = vmul.f32 %v1386, %v1498
          %v1500 = vrcp.pop %v1426
          %v1501 = vmul.f32 %v1387, %v1500
          %v1502 = vrcp.pop %v1431
          %v1503 = vmul.f32 %v1388, %v1502
          %v1504 = vrcp.pop %v1436
          %v1505 = vmul.f32 %v1389, %v1504
          %v1506 = vrcp.pop %v1441
          %v1507 = vmul.f32 %v1390, %v1506
          %v1508 = vrcp.pop %v1446
          %v1509 = vmul.f32 %v1391, %v1508
          %v1510 = vrcp.pop %v1451
          %v1511 = vmul.f32 %v1392, %v1510
          %v1512 = vrcp.pop %v1456
          %v1513 = vmul.f32 %v1393, %v1512
          %v1514 = vrcp.pop %v1461
          %v1515 = vmul.f32 %v1394, %v1514
          %v1516 = vrcp.pop %v1466
          %v1517 = vmul.f32 %v1395, %v1516
          %v1518 = vrcp.pop %v1471
          %v1519 = vmul.f32 %v1396, %v1518
          %v1520 = vrcp.pop %v1476
          %v1521 = vmul.f32 %v1397, %v1520
          %v1522 = vrcp.pop %v1481
          %v1523 = vmul.f32 %v1398, %v1522
          %v1524 = vrcp.pop %v1486
          %v1525 = vmul.f32 %v1399, %v1524
          %v1526 = vrcp.pop %v1491
          %v1527 = vmul.f32 %v1400, %v1526
          %v1528 = vrcp.pop %v1496
          %v1529 = vmul.f32 %v1401, %v1528
          %s1530 = sld [smem:[#allocation5]]
          %1531 = vxpose.xlu0.b32.start [1/16] %v1499, 128
          %1532 = vxpose.xlu0.b32.cont [2/16] %v1501, 128
          %1533 = vxpose.xlu0.b32.cont [3/16] %v1503, 128
          %1534 = vxpose.xlu0.b32.cont [4/16] %v1505, 128
          %1535 = vxpose.xlu0.b32.cont [5/16] %v1507, 128
          %1536 = vxpose.xlu0.b32.cont [6/16] %v1509, 128
          %1537 = vxpose.xlu0.b32.cont [7/16] %v1511, 128
          %1538 = vxpose.xlu0.b32.cont [8/16] %v1513, 128
          %1539 = vxpose.xlu0.b32.cont [9/16] %v1515, 128
          %1540 = vxpose.xlu0.b32.cont [10/16] %v1517, 128
          %1541 = vxpose.xlu0.b32.cont [11/16] %v1519, 128
          %1542 = vxpose.xlu0.b32.cont [12/16] %v1521, 128
          %1543 = vxpose.xlu0.b32.cont [13/16] %v1523, 128
          %1544 = vxpose.xlu0.b32.cont [14/16] %v1525, 128
          %1545 = vxpose.xlu0.b32.cont [15/16] %v1527, 128
          %1546 = vxpose.xlu0.b32.end [16/16] %v1529, 128
          %v1547 = vpop.trf.xlu0
          %v1548 = vpop.trf.xlu0
          %v1549 = vpop.trf.xlu0
          %v1550 = vpop.trf.xlu0
          %v1551 = vpop.trf.xlu0
          %v1552 = vpop.trf.xlu0
          %v1553 = vpop.trf.xlu0
          %v1554 = vpop.trf.xlu0
          %v1555 = vpop.trf.xlu0
          %v1556 = vpop.trf.xlu0
          %v1557 = vpop.trf.xlu0
          %v1558 = vpop.trf.xlu0
          %v1559 = vpop.trf.xlu0
          %v1560 = vpop.trf.xlu0
          %v1561 = vpop.trf.xlu0
          %v1562 = vpop.trf.xlu0
          %v1563 = vstv %s1530
          %v1564 = vmul.f32 %v1563, %v1547
          %v1565 = vmul.f32 %v1563, %v1548
          %v1566 = vmul.f32 %v1563, %v1549
          %v1567 = vmul.f32 %v1563, %v1550
          %v1568 = vmul.f32 %v1563, %v1551
          %v1569 = vmul.f32 %v1563, %v1552
          %v1570 = vmul.f32 %v1563, %v1553
          %v1571 = vmul.f32 %v1563, %v1554
          %v1572 = vld [vmem:[%s402] sm:$0xff]
          %v1573 = vld [vmem:[%s402 + $0x8] sm:$0xff]
          %v1574 = vld [vmem:[%s402 + $0x10] sm:$0xff]
          %v1575 = vld [vmem:[%s402 + $0x18] sm:$0xff]
          %v1576 = vld [vmem:[%s402 + $0x20] sm:$0xff]
          %v1577 = vld [vmem:[%s402 + $0x28] sm:$0xff]
          %v1578 = vld [vmem:[%s402 + $0x30] sm:$0xff]
          %v1579 = vld [vmem:[%s402 + $0x38] sm:$0xff]
          %v1580 = vadd.f32 %v1564, %v1572
          %v1581 = vadd.f32 %v1565, %v1573
          %v1582 = vadd.f32 %v1566, %v1574
          %v1583 = vadd.f32 %v1567, %v1575
          %v1584 = vadd.f32 %v1568, %v1576
          %v1585 = vadd.f32 %v1569, %v1577
          %v1586 = vadd.f32 %v1570, %v1578
          %v1587 = vadd.f32 %v1571, %v1579
          %1588 = vst [vmem:[%s447] sm:$0xff] %v1580
          %1589 = vst [vmem:[%s447 + $0x8] sm:$0xff] %v1581
          %1590 = vst [vmem:[%s447 + $0x10] sm:$0xff] %v1582
          %1591 = vst [vmem:[%s447 + $0x18] sm:$0xff] %v1583
          %1592 = vst [vmem:[%s447 + $0x20] sm:$0xff] %v1584
          %1593 = vst [vmem:[%s447 + $0x28] sm:$0xff] %v1585
          %1594 = vst [vmem:[%s447 + $0x30] sm:$0xff] %v1586
          %1595 = vst [vmem:[%s447 + $0x38] sm:$0xff] %v1587
        $region124: #{tpu_custom_call.1} parent=107 // pred_fallthru
          _
        %s1596 = sand.u32 %s182, 1
        %s1597 = scalar_lea.sflag [#allocation9], %s1596
        %s1598 = sand.u32 %s182, 1
        %s1599 = smul.addr %s1598, 64
        %s1600 = scalar_lea.vmem [#allocation8], %s1599
        // Predicated region
        $region125: #{tpu_custom_call.1} parent=107 // pred_check
          %p1601 = pneg %p192
        $region126: #{tpu_custom_call.1} parent=107 // pred_check_branch
          %1603 = sbr.rel (%p1601) target = $region128
        $region127: #{tpu_custom_call.1} parent=107 // pred_region
          %s1605 = ssub.s32 1024, 1024
          %1606 = vsyncadd %s1597, %s1605
          %s1607 = smul.addr %s25, 16
          %s1608 = sadd.s32 %s26, %s1607
          %s1609 = smul.addr %s1608, 128
          %s1610 = scalar_lea.hbm %s5, %s1609
          %s1611 = sshll.u32 %s1600, 4
          %s1612 = int_to_ptr.vmem [resolvable:$true] %s1611
          %1617 = dma.vmem_to_hbm [thread:$0]  %s1612, 1024, %s1610, %s1597, 128, 256, 8
        $region128: #{tpu_custom_call.1} parent=107 // pred_fallthru
          _
      $region108: #{tpu_custom_call.1} parent=5 // pred_fallthru
        _
      %p1618 = scmp.le.s32.totalorder 2, %s15
      // Predicated region
      $region129: #{tpu_custom_call.1} parent=5 // pred_check
        %p1619 = pneg %p1618
      $region130: #{tpu_custom_call.1} parent=5 // pred_check_branch
        %1621 = sbr.rel (%p1619) target = $region132
      $region131: #{tpu_custom_call.1} parent=5 // pred_region
        %s1622 = ssub.s32 %s15, 2
        // Predicated region
        $region133: #{tpu_custom_call.1} parent=131 // pred_check
          %p1623 = pneg %p198
        $region134: #{tpu_custom_call.1} parent=131 // pred_check_branch
          %1625 = sbr.rel (%p1623) target = $region136
        $region135: #{tpu_custom_call.1} parent=131 // pred_region
          %s1626 = sand.u32 %s183, 1
          %s1627 = scalar_lea.sflag [#allocation9], %s1626
          %s1628 = sand.u32 %s183, 1
          %s1629 = smul.addr %s1628, 64
          %s1630 = scalar_lea.vmem [#allocation8], %s1629
          %1631 = dma.done %s1627, 1024
        $region136: #{tpu_custom_call.1} parent=131 // pred_fallthru
          _
      $region132: #{tpu_custom_call.1} parent=5 // pred_fallthru
        _
    $region6: #{tpu_custom_call.1} parent=1 // loop_footer
      %s19 = sadd.s32 1, %s15
    $region7: #{tpu_custom_call.1} parent=1 // loop_footer_branch
      %14 = sbr.rel target = $region3
    $region8: #{tpu_custom_call.1} parent=1 // loop_exit
      _
    %1632 = vsyncpa [#allocation9], 1
    %s1633 = scalar_lea.sflag [#allocation9], 1
    %1634 = vsyncpa %s1633, 1

</llo_original>
